<compile_context>
chip_gen: v7x
topology: tpu7x:2x2x1
jax: 0.10.0
libtpu: 0.0.40
codegen_flags: <defaults>
</compile_context>

<pallas_src>
import jax
import jax.numpy as jnp
import numpy as np
from jax import lax
from jax.experimental import pallas as pl
from jax.experimental.pallas import tpu as pltpu


def _gnn_kernel(node_ref, adj_ref, w1_ref, b1_ref, w2_ref, b2_ref,
                wru_ref, wrv_ref, br1_ref,
                h_final_ref, a_ref, b_ref,
                h_scr, madj_scr):
    """GNN layers + sequential (Gauss-Seidel) and parallel aggregations.

    Also emits the per-node relation-head projections
        a = h_final @ Wu + b_rel   and   b = h_final @ Wv
    so the tiled relation-head kernel only has to do broadcast adds.
    """
    n = adj_ref.shape[0]

    # Masked adjacency computed once (hoisted out of the sequential loop).
    madj_scr[...] = jnp.where(adj_ref[...] > 0.0, adj_ref[...], 0.0)

    # GNN layer 1 + ReLU.
    h_scr[...] = jnp.maximum(
        jnp.dot(node_ref[...], w1_ref[...], preferred_element_type=jnp.float32)
        + b1_ref[...], 0.0)

    # First aggregation: sequential in-place update, matching the torch loop
    # (h[v] for v < u has already been updated).  n is a small static int so
    # the loop is fully unrolled at trace time with static slice starts
    # (maximum scheduler visibility); for large n use lax.fori_loop(unroll=k).
    for u in range(n):
        row = madj_scr[pl.ds(u, 1), :]                                   # (1, n)
        neigh = jnp.dot(row, h_scr[...], preferred_element_type=jnp.float32)
        h_scr[pl.ds(u, 1), :] = jnp.maximum(h_scr[pl.ds(u, 1), :] + neigh, 0.0)

    # GNN layer 2 + ReLU.
    h2 = jnp.maximum(
        jnp.dot(h_scr[...], w2_ref[...], preferred_element_type=jnp.float32)
        + b2_ref[...], 0.0)

    # Second aggregation: parallel (neighbor sums use the pre-update h).
    h_final = jnp.maximum(
        h2 + jnp.dot(madj_scr[...], h2, preferred_element_type=jnp.float32), 0.0)
    h_final_ref[...] = h_final

    # Per-node relation-head projections (relation-head bias folded into `a`).
    a_ref[...] = (jnp.dot(h_final, wru_ref[...],
                          preferred_element_type=jnp.float32) + br1_ref[...])
    b_ref[...] = jnp.dot(h_final, wrv_ref[...],
                         preferred_element_type=jnp.float32)


def _relation_head_kernel(a_ref, b_ref, e_ref, wre_ref, wr2_ref, br2_ref,
                          probs_ref):
    """Relation head for one tile of `u` rows (all v at once).

    hid[u, v]   = relu(a[u] + b[v] + edge[u, v] @ We)
    probs[u, v] = sigmoid(hid[u, v] . w2 + b2),   probs[u, u] = 0
    """
    tu, h = a_ref.shape
    n = b_ref.shape[0]

    # Edge projection on the MXU: (tu*n, Ep) @ (Ep, H), bf16 in / f32 accum.
    eproj = jnp.dot(e_ref[...], wre_ref[...],
                    preferred_element_type=jnp.float32).reshape(tu, n, h)

    # Pair features by broadcast-add on the VPU (replaces the Su/Sv
    # gather-by-matmul of the previous version: no O(N^3*H) FLOPs, no N^3
    # bytes of selection-matrix HBM traffic).
    hid = jnp.maximum(a_ref[...][:, None, :] + b_ref[...][None, :, :] + eproj,
                      0.0)                                            # (tu, n, h)

    # Width-1 output head as multiply + lane reduction (an (.., H) @ (H, 1)
    # matmul would use <1% of the MXU output columns).
    logits = jnp.sum(hid * wr2_ref[...], axis=-1) + br2_ref[...]      # (tu, n)
    probs = jax.nn.sigmoid(logits)

    # Zero the diagonal (u == v); mask generated in-kernel (no mask input).
    u_ids = pl.program_id(0) * tu + lax.broadcasted_iota(jnp.int32, (tu, n), 0)
    v_ids = lax.broadcasted_iota(jnp.int32, (tu, n), 1)
    probs_ref[...] = jnp.where(u_ids == v_ids, 0.0, probs)


def relation_prediction_forward(node_features, adjacency, edge_features, params,
                                *, tile_u=8):
    n, _ = node_features.shape
    hidden = params["w1"].shape[1]
    e_dim = edge_features.shape[1]
    assert n % tile_u == 0 and tile_u % 8 == 0, \
        "tile_u must divide N and be a multiple of 8"
    f32 = jnp.float32

    # ---- Kernel 1: GNN + per-node relation projections (single grid step) ----
    gnn_inputs = [node_features, adjacency,
                  params["w1"], params["b1"], params["w2"], params["b2"],
                  params["wr_u"], params["wr_v"], params["br1"]]
    h_final, a_proj, b_proj = pl.pallas_call(
        _gnn_kernel,
        out_shape=(jax.ShapeDtypeStruct((n, hidden), f32),) * 3,
        grid_spec=pltpu.PrefetchScalarGridSpec(
            num_scalar_prefetch=0,
            grid=(1,),
            in_specs=[pl.BlockSpec(x.shape, lambda i: (0, 0)) for x in gnn_inputs],
            out_specs=(pl.BlockSpec((n, hidden), lambda i: (0, 0)),) * 3,
            scratch_shapes=[pltpu.VMEM((n, hidden), f32),   # h, updated in place
                            pltpu.VMEM((n, n), f32)],       # masked adjacency
        ),
        compiler_params=pltpu.CompilerParams(
            dimension_semantics=("arbitrary",),
            vmem_limit_bytes=32 * 1024 * 1024,
        ),
    )(*gnn_inputs)

    # ---- Kernel 2: relation head, tiled over u ("parallel" -> megacore) ----
    # Pad the tiny edge contraction dim (9 -> 16) and stream edges as bf16 (the
    # only O(N^2) input); activations / biases / GNN path stay f32.
    # tile_u should be sized so 2x(edge tile + a tile) + b + the (tile_u,N,H)
    # hid intermediate stay well under the VMEM budget (64 MiB on v7x).
    ep_dim = ((e_dim + 7) // 8) * 8
    edge_p = jnp.pad(edge_features.astype(jnp.bfloat16),
                     ((0, 0), (0, ep_dim - e_dim)))                   # (n*n, ep)
    wre_p = jnp.pad(params["wr_e"].astype(jnp.bfloat16),
                    ((0, ep_dim - e_dim), (0, 0)))                    # (ep, H)
    wr2_t = params["wr2"].T                                           # (1, H)
    br2 = params["br2"]                                               # (1, 1)

    probs = pl.pallas_call(
        _relation_head_kernel,
        out_shape=jax.ShapeDtypeStruct((n, n), f32),        # lane-dense (N, N)
        grid_spec=pltpu.PrefetchScalarGridSpec(
            num_scalar_prefetch=0,
            grid=(n // tile_u,),
            in_specs=[
                pl.BlockSpec((tile_u, hidden), lambda i: (i, 0)),      # a tile
                pl.BlockSpec((n, hidden), lambda i: (0, 0)),           # b (resident)
                pl.BlockSpec((tile_u * n, ep_dim), lambda i: (i, 0)),  # edge tile
                pl.BlockSpec((ep_dim, hidden), lambda i: (0, 0)),      # We
                pl.BlockSpec((1, hidden), lambda i: (0, 0)),           # w2^T
                pl.BlockSpec((1, 1), lambda i: (0, 0)),                # b2
            ],
            out_specs=pl.BlockSpec((tile_u, n), lambda i: (i, 0)),
        ),
        compiler_params=pltpu.CompilerParams(
            dimension_semantics=("parallel",),   # independent u-tiles
            vmem_limit_bytes=32 * 1024 * 1024,
        ),
    )(a_proj, b_proj, edge_p, wre_p, wr2_t, br2)

    return h_final, probs


def init_params(key, node_dim, hidden_dim, edge_dim):
    """Deterministic init mimicking nn.Linear (uniform +-1/sqrt(fan_in))."""
    def linear(k, fan_in, fan_out):
        k1, k2 = jax.random.split(k)
        bound = 1.0 / np.sqrt(fan_in)
        w = jax.random.uniform(k1, (fan_in, fan_out), jnp.float32, -bound, bound)
        b = jax.random.uniform(k2, (1, fan_out), jnp.float32, -bound, bound)
        return w, b

    keys = jax.random.split(key, 4)
    w1, b1 = linear(keys[0], node_dim, hidden_dim)
    w2, b2 = linear(keys[1], hidden_dim, hidden_dim)
    wr, br1 = linear(keys[2], 2 * hidden_dim + edge_dim, hidden_dim)
    wr2, br2 = linear(keys[3], hidden_dim, 1)
    return {
        "w1": w1, "b1": b1, "w2": w2, "b2": b2,
        "wr_u": wr[:hidden_dim],
        "wr_v": wr[hidden_dim:2 * hidden_dim],
        "wr_e": wr[2 * hidden_dim:],
        "br1": br1, "wr2": wr2, "br2": br2,
    }


def reference_forward(node_features, adj, edge_features, params):
    """Pure-JAX transcription of the PyTorch forward (loops and all)."""
    n = adj.shape[0]
    x = jax.nn.relu(node_features @ params["w1"] + params["b1"])
    h = x
    for u in range(n):  # sequential in-place update
        w = jnp.where(adj[u] > 0, adj[u], 0.0)
        h = h.at[u].set(jax.nn.relu(h[u] + w @ h))
    h = jax.nn.relu(h @ params["w2"] + params["b2"])
    madj = jnp.where(adj > 0, adj, 0.0)
    h_final = jax.nn.relu(h + madj @ h)
    wr = jnp.concatenate([params["wr_u"], params["wr_v"], params["wr_e"]], axis=0)
    probs = jnp.zeros((n, n), jnp.float32)
    for u in range(n):
        for v in range(n):
            if u != v:
                pair = jnp.concatenate(
                    [h_final[u], h_final[v], edge_features[u * n + v]])
                hid = jax.nn.relu(pair @ wr + params["br1"][0])
                p = jax.nn.sigmoid(hid @ params["wr2"][:, 0] + params["br2"][0, 0])
                probs = probs.at[u, v].set(p)
    return h_final, probs


if __name__ == "__main__":
    N, NODE_DIM, HIDDEN_DIM, EDGE_DIM = 16, 256, 128, 9
    TILE_U = 8   # -> grid of 2 u-tiles, exercising the tiled / pipelined path

    key = jax.random.PRNGKey(0)
    k_params, k_node, k_adj, k_edge = jax.random.split(key, 4)

    params = init_params(k_params, NODE_DIM, HIDDEN_DIM, EDGE_DIM)
    node_features = jax.random.normal(k_node, (N, NODE_DIM), jnp.float32)
    # adjacency with a mix of positive (active) and non-positive (ignored) entries
    adjacency = jax.random.uniform(k_adj, (N, N), jnp.float32, -0.6, 0.4)
    edge_features = jax.random.normal(k_edge, (N * N, EDGE_DIM), jnp.float32)

    h_final, relation_probs = relation_prediction_forward(
        node_features, adjacency, edge_features, params, tile_u=TILE_U)
    jax.block_until_ready((h_final, relation_probs))

    h_ref, p_ref = reference_forward(node_features, adjacency, edge_features, params)
    np.testing.assert_allclose(np.asarray(h_final), np.asarray(h_ref),
                               rtol=1e-3, atol=1e-3)
    np.testing.assert_allclose(np.asarray(relation_probs), np.asarray(p_ref),
                               rtol=2e-3, atol=2e-3)

    print("KERNEL_OK")
</pallas_src>

<mosaic_0001>
module attributes {stable_mosaic.version = 11 : i64} {
  func.func @_gnn_kernel(%arg0: i32, %arg1: memref<16x256xf32, #tpu.memory_space<vmem>>, %arg2: memref<16x16xf32, #tpu.memory_space<vmem>>, %arg3: memref<256x128xf32, #tpu.memory_space<vmem>>, %arg4: memref<1x128xf32, #tpu.memory_space<vmem>>, %arg5: memref<128x128xf32, #tpu.memory_space<vmem>>, %arg6: memref<1x128xf32, #tpu.memory_space<vmem>>, %arg7: memref<128x128xf32, #tpu.memory_space<vmem>>, %arg8: memref<128x128xf32, #tpu.memory_space<vmem>>, %arg9: memref<1x128xf32, #tpu.memory_space<vmem>>, %arg10: memref<16x128xf32, #tpu.memory_space<vmem>>, %arg11: memref<16x128xf32, #tpu.memory_space<vmem>>, %arg12: memref<16x128xf32, #tpu.memory_space<vmem>>, %arg13: memref<16x128xf32, #tpu.memory_space<vmem>>, %arg14: memref<16x16xf32, #tpu.memory_space<vmem>>) attributes {dimension_semantics = [#tpu.dimension_semantics<arbitrary>], iteration_bounds = array<i64: 1>, scalar_prefetch = 0 : i64, scratch_operands = 2 : i64, tpu.core_type = #tpu.core_type<tc>, window_params = [{pipeline_mode = #tpu.pipeline_mode<synchronous>, transform_indices = @transform_0, window_bounds = array<i64: 16, 256>}, {pipeline_mode = #tpu.pipeline_mode<synchronous>, transform_indices = @transform_1, window_bounds = array<i64: 16, 16>}, {pipeline_mode = #tpu.pipeline_mode<synchronous>, transform_indices = @transform_2, window_bounds = array<i64: 256, 128>}, {pipeline_mode = #tpu.pipeline_mode<synchronous>, transform_indices = @transform_3, window_bounds = array<i64: 1, 128>}, {pipeline_mode = #tpu.pipeline_mode<synchronous>, transform_indices = @transform_4, window_bounds = array<i64: 128, 128>}, {pipeline_mode = #tpu.pipeline_mode<synchronous>, transform_indices = @transform_5, window_bounds = array<i64: 1, 128>}, {pipeline_mode = #tpu.pipeline_mode<synchronous>, transform_indices = @transform_6, window_bounds = array<i64: 128, 128>}, {pipeline_mode = #tpu.pipeline_mode<synchronous>, transform_indices = @transform_7, window_bounds = array<i64: 128, 128>}, {pipeline_mode = #tpu.pipeline_mode<synchronous>, transform_indices = @transform_8, window_bounds = array<i64: 1, 128>}, {pipeline_mode = #tpu.pipeline_mode<synchronous>, transform_indices = @transform_9, window_bounds = array<i64: 16, 128>}, {pipeline_mode = #tpu.pipeline_mode<synchronous>, transform_indices = @transform_10, window_bounds = array<i64: 16, 128>}, {pipeline_mode = #tpu.pipeline_mode<synchronous>, transform_indices = @transform_11, window_bounds = array<i64: 16, 128>}]} {
    %c0 = arith.constant 0 : index
    %c0_0 = arith.constant 0 : index
    %0 = vector.load %arg2[%c0, %c0_0] : memref<16x16xf32, #tpu.memory_space<vmem>>, vector<16x16xf32>
    %cst = arith.constant 0.000000e+00 : f32
    %1 = vector.broadcast %cst : f32 to vector<16x16xf32>
    %2 = arith.cmpf ogt, %0, %1 : vector<16x16xf32>
    %c0_1 = arith.constant 0 : index
    %c0_2 = arith.constant 0 : index
    %3 = vector.load %arg2[%c0_1, %c0_2] : memref<16x16xf32, #tpu.memory_space<vmem>>, vector<16x16xf32>
    %cst_3 = arith.constant 0.000000e+00 : f32
    %4 = vector.broadcast %cst_3 : f32 to vector<16x16xf32>
    %5 = arith.select %2, %3, %4 : vector<16x16xi1>, vector<16x16xf32>
    %c0_4 = arith.constant 0 : index
    %c0_5 = arith.constant 0 : index
    %6 = vector.load %arg14[%c0_4, %c0_5] : memref<16x16xf32, #tpu.memory_space<vmem>>, vector<16x16xf32>
    tpu.vector_store %arg14[%c0_4, %c0_5], %5 {strides = array<i32>} : memref<16x16xf32, #tpu.memory_space<vmem>>, vector<16x16xf32>,
    %c0_6 = arith.constant 0 : index
    %c0_7 = arith.constant 0 : index
    %7 = vector.load %arg1[%c0_6, %c0_7] : memref<16x256xf32, #tpu.memory_space<vmem>>, vector<16x256xf32>
    %c0_8 = arith.constant 0 : index
    %c0_9 = arith.constant 0 : index
    %8 = vector.load %arg3[%c0_8, %c0_9] : memref<256x128xf32, #tpu.memory_space<vmem>>, vector<256x128xf32>
    %cst_10 = arith.constant dense<0.000000e+00> : vector<16x128xf32>
    %9 = tpu.matmul %7, %8, %cst_10 {dimension_numbers = #tpu.dot_dimension_numbers<[1], [0], [0], [1], [0, 0, 1, 1], [], []>} : vector<16x256xf32>, vector<256x128xf32>, vector<16x128xf32> -> vector<16x128xf32>
    %c0_11 = arith.constant 0 : index
    %c0_12 = arith.constant 0 : index
    %10 = vector.load %arg4[%c0_11, %c0_12] : memref<1x128xf32, #tpu.memory_space<vmem>>, vector<1x128xf32>
    %11 = vector.broadcast %10 : vector<1x128xf32> to vector<16x128xf32>
    %12 = arith.addf %9, %11 : vector<16x128xf32>
    %cst_13 = arith.constant 0.000000e+00 : f32
    %13 = vector.broadcast %cst_13 : f32 to vector<16x128xf32>
    %14 = arith.maximumf %12, %13 : vector<16x128xf32>
    %c0_14 = arith.constant 0 : index
    %c0_15 = arith.constant 0 : index
    %15 = vector.load %arg13[%c0_14, %c0_15] : memref<16x128xf32, #tpu.memory_space<vmem>>, vector<16x128xf32>
    tpu.vector_store %arg13[%c0_14, %c0_15], %14 {strides = array<i32>} : memref<16x128xf32, #tpu.memory_space<vmem>>, vector<16x128xf32>,
    %c0_16 = arith.constant 0 : index
    %c0_17 = arith.constant 0 : index
    %16 = vector.load %arg14[%c0_16, %c0_17] : memref<16x16xf32, #tpu.memory_space<vmem>>, vector<1x16xf32>
    %c0_18 = arith.constant 0 : index
    %c0_19 = arith.constant 0 : index
    %17 = vector.load %arg13[%c0_18, %c0_19] : memref<16x128xf32, #tpu.memory_space<vmem>>, vector<16x128xf32>
    %cst_20 = arith.constant dense<0.000000e+00> : vector<1x128xf32>
    %18 = tpu.matmul %16, %17, %cst_20 {dimension_numbers = #tpu.dot_dimension_numbers<[1], [0], [0], [1], [0, 0, 1, 1], [], []>} : vector<1x16xf32>, vector<16x128xf32>, vector<1x128xf32> -> vector<1x128xf32>
    %c0_21 = arith.constant 0 : index
    %c0_22 = arith.constant 0 : index
    %19 = vector.load %arg13[%c0_21, %c0_22] : memref<16x128xf32, #tpu.memory_space<vmem>>, vector<1x128xf32>
    %20 = arith.addf %19, %18 : vector<1x128xf32>
    %cst_23 = arith.constant 0.000000e+00 : f32
    %21 = vector.broadcast %cst_23 : f32 to vector<1x128xf32>
    %22 = arith.maximumf %20, %21 : vector<1x128xf32>
    %c0_24 = arith.constant 0 : index
    %c0_25 = arith.constant 0 : index
    %23 = vector.load %arg13[%c0_24, %c0_25] : memref<16x128xf32, #tpu.memory_space<vmem>>, vector<1x128xf32>
    tpu.vector_store %arg13[%c0_24, %c0_25], %22 {strides = array<i32>} : memref<16x128xf32, #tpu.memory_space<vmem>>, vector<1x128xf32>,
    %c1 = arith.constant 1 : index
    %c0_26 = arith.constant 0 : index
    %24 = vector.load %arg14[%c1, %c0_26] : memref<16x16xf32, #tpu.memory_space<vmem>>, vector<1x16xf32>
    %c0_27 = arith.constant 0 : index
    %c0_28 = arith.constant 0 : index
    %25 = vector.load %arg13[%c0_27, %c0_28] : memref<16x128xf32, #tpu.memory_space<vmem>>, vector<16x128xf32>
    %cst_29 = arith.constant dense<0.000000e+00> : vector<1x128xf32>
    %26 = tpu.matmul %24, %25, %cst_29 {dimension_numbers = #tpu.dot_dimension_numbers<[1], [0], [0], [1], [0, 0, 1, 1], [], []>} : vector<1x16xf32>, vector<16x128xf32>, vector<1x128xf32> -> vector<1x128xf32>
    %c1_30 = arith.constant 1 : index
    %c0_31 = arith.constant 0 : index
    %27 = vector.load %arg13[%c1_30, %c0_31] : memref<16x128xf32, #tpu.memory_space<vmem>>, vector<1x128xf32>
    %28 = arith.addf %27, %26 : vector<1x128xf32>
    %cst_32 = arith.constant 0.000000e+00 : f32
    %29 = vector.broadcast %cst_32 : f32 to vector<1x128xf32>
    %30 = arith.maximumf %28, %29 : vector<1x128xf32>
    %c1_33 = arith.constant 1 : index
    %c0_34 = arith.constant 0 : index
    %31 = vector.load %arg13[%c1_33, %c0_34] : memref<16x128xf32, #tpu.memory_space<vmem>>, vector<1x128xf32>
    tpu.vector_store %arg13[%c1_33, %c0_34], %30 {strides = array<i32>} : memref<16x128xf32, #tpu.memory_space<vmem>>, vector<1x128xf32>,
    %c2 = arith.constant 2 : index
    %c0_35 = arith.constant 0 : index
    %32 = vector.load %arg14[%c2, %c0_35] : memref<16x16xf32, #tpu.memory_space<vmem>>, vector<1x16xf32>
    %c0_36 = arith.constant 0 : index
    %c0_37 = arith.constant 0 : index
    %33 = vector.load %arg13[%c0_36, %c0_37] : memref<16x128xf32, #tpu.memory_space<vmem>>, vector<16x128xf32>
    %cst_38 = arith.constant dense<0.000000e+00> : vector<1x128xf32>
    %34 = tpu.matmul %32, %33, %cst_38 {dimension_numbers = #tpu.dot_dimension_numbers<[1], [0], [0], [1], [0, 0, 1, 1], [], []>} : vector<1x16xf32>, vector<16x128xf32>, vector<1x128xf32> -> vector<1x128xf32>
    %c2_39 = arith.constant 2 : index
    %c0_40 = arith.constant 0 : index
    %35 = vector.load %arg13[%c2_39, %c0_40] : memref<16x128xf32, #tpu.memory_space<vmem>>, vector<1x128xf32>
    %36 = arith.addf %35, %34 : vector<1x128xf32>
    %cst_41 = arith.constant 0.000000e+00 : f32
    %37 = vector.broadcast %cst_41 : f32 to vector<1x128xf32>
    %38 = arith.maximumf %36, %37 : vector<1x128xf32>
    %c2_42 = arith.constant 2 : index
    %c0_43 = arith.constant 0 : index
    %39 = vector.load %arg13[%c2_42, %c0_43] : memref<16x128xf32, #tpu.memory_space<vmem>>, vector<1x128xf32>
    tpu.vector_store %arg13[%c2_42, %c0_43], %38 {strides = array<i32>} : memref<16x128xf32, #tpu.memory_space<vmem>>, vector<1x128xf32>,
    %c3 = arith.constant 3 : index
    %c0_44 = arith.constant 0 : index
    %40 = vector.load %arg14[%c3, %c0_44] : memref<16x16xf32, #tpu.memory_space<vmem>>, vector<1x16xf32>
    %c0_45 = arith.constant 0 : index
    %c0_46 = arith.constant 0 : index
    %41 = vector.load %arg13[%c0_45, %c0_46] : memref<16x128xf32, #tpu.memory_space<vmem>>, vector<16x128xf32>
    %cst_47 = arith.constant dense<0.000000e+00> : vector<1x128xf32>
    %42 = tpu.matmul %40, %41, %cst_47 {dimension_numbers = #tpu.dot_dimension_numbers<[1], [0], [0], [1], [0, 0, 1, 1], [], []>} : vector<1x16xf32>, vector<16x128xf32>, vector<1x128xf32> -> vector<1x128xf32>
    %c3_48 = arith.constant 3 : index
    %c0_49 = arith.constant 0 : index
    %43 = vector.load %arg13[%c3_48, %c0_49] : memref<16x128xf32, #tpu.memory_space<vmem>>, vector<1x128xf32>
    %44 = arith.addf %43, %42 : vector<1x128xf32>
    %cst_50 = arith.constant 0.000000e+00 : f32
    %45 = vector.broadcast %cst_50 : f32 to vector<1x128xf32>
    %46 = arith.maximumf %44, %45 : vector<1x128xf32>
    %c3_51 = arith.constant 3 : index
    %c0_52 = arith.constant 0 : index
    %47 = vector.load %arg13[%c3_51, %c0_52] : memref<16x128xf32, #tpu.memory_space<vmem>>, vector<1x128xf32>
    tpu.vector_store %arg13[%c3_51, %c0_52], %46 {strides = array<i32>} : memref<16x128xf32, #tpu.memory_space<vmem>>, vector<1x128xf32>,
    %c4 = arith.constant 4 : index
    %c0_53 = arith.constant 0 : index
    %48 = vector.load %arg14[%c4, %c0_53] : memref<16x16xf32, #tpu.memory_space<vmem>>, vector<1x16xf32>
    %c0_54 = arith.constant 0 : index
    %c0_55 = arith.constant 0 : index
    %49 = vector.load %arg13[%c0_54, %c0_55] : memref<16x128xf32, #tpu.memory_space<vmem>>, vector<16x128xf32>
    %cst_56 = arith.constant dense<0.000000e+00> : vector<1x128xf32>
    %50 = tpu.matmul %48, %49, %cst_56 {dimension_numbers = #tpu.dot_dimension_numbers<[1], [0], [0], [1], [0, 0, 1, 1], [], []>} : vector<1x16xf32>, vector<16x128xf32>, vector<1x128xf32> -> vector<1x128xf32>
    %c4_57 = arith.constant 4 : index
    %c0_58 = arith.constant 0 : index
    %51 = vector.load %arg13[%c4_57, %c0_58] : memref<16x128xf32, #tpu.memory_space<vmem>>, vector<1x128xf32>
    %52 = arith.addf %51, %50 : vector<1x128xf32>
    %cst_59 = arith.constant 0.000000e+00 : f32
    %53 = vector.broadcast %cst_59 : f32 to vector<1x128xf32>
    %54 = arith.maximumf %52, %53 : vector<1x128xf32>
    %c4_60 = arith.constant 4 : index
    %c0_61 = arith.constant 0 : index
    %55 = vector.load %arg13[%c4_60, %c0_61] : memref<16x128xf32, #tpu.memory_space<vmem>>, vector<1x128xf32>
    tpu.vector_store %arg13[%c4_60, %c0_61], %54 {strides = array<i32>} : memref<16x128xf32, #tpu.memory_space<vmem>>, vector<1x128xf32>,
    %c5 = arith.constant 5 : index
    %c0_62 = arith.constant 0 : index
    %56 = vector.load %arg14[%c5, %c0_62] : memref<16x16xf32, #tpu.memory_space<vmem>>, vector<1x16xf32>
    %c0_63 = arith.constant 0 : index
    %c0_64 = arith.constant 0 : index
    %57 = vector.load %arg13[%c0_63, %c0_64] : memref<16x128xf32, #tpu.memory_space<vmem>>, vector<16x128xf32>
    %cst_65 = arith.constant dense<0.000000e+00> : vector<1x128xf32>
    %58 = tpu.matmul %56, %57, %cst_65 {dimension_numbers = #tpu.dot_dimension_numbers<[1], [0], [0], [1], [0, 0, 1, 1], [], []>} : vector<1x16xf32>, vector<16x128xf32>, vector<1x128xf32> -> vector<1x128xf32>
    %c5_66 = arith.constant 5 : index
    %c0_67 = arith.constant 0 : index
    %59 = vector.load %arg13[%c5_66, %c0_67] : memref<16x128xf32, #tpu.memory_space<vmem>>, vector<1x128xf32>
    %60 = arith.addf %59, %58 : vector<1x128xf32>
    %cst_68 = arith.constant 0.000000e+00 : f32
    %61 = vector.broadcast %cst_68 : f32 to vector<1x128xf32>
    %62 = arith.maximumf %60, %61 : vector<1x128xf32>
    %c5_69 = arith.constant 5 : index
    %c0_70 = arith.constant 0 : index
    %63 = vector.load %arg13[%c5_69, %c0_70] : memref<16x128xf32, #tpu.memory_space<vmem>>, vector<1x128xf32>
    tpu.vector_store %arg13[%c5_69, %c0_70], %62 {strides = array<i32>} : memref<16x128xf32, #tpu.memory_space<vmem>>, vector<1x128xf32>,
    %c6 = arith.constant 6 : index
    %c0_71 = arith.constant 0 : index
    %64 = vector.load %arg14[%c6, %c0_71] : memref<16x16xf32, #tpu.memory_space<vmem>>, vector<1x16xf32>
    %c0_72 = arith.constant 0 : index
    %c0_73 = arith.constant 0 : index
    %65 = vector.load %arg13[%c0_72, %c0_73] : memref<16x128xf32, #tpu.memory_space<vmem>>, vector<16x128xf32>
    %cst_74 = arith.constant dense<0.000000e+00> : vector<1x128xf32>
    %66 = tpu.matmul %64, %65, %cst_74 {dimension_numbers = #tpu.dot_dimension_numbers<[1], [0], [0], [1], [0, 0, 1, 1], [], []>} : vector<1x16xf32>, vector<16x128xf32>, vector<1x128xf32> -> vector<1x128xf32>
    %c6_75 = arith.constant 6 : index
    %c0_76 = arith.constant 0 : index
    %67 = vector.load %arg13[%c6_75, %c0_76] : memref<16x128xf32, #tpu.memory_space<vmem>>, vector<1x128xf32>
    %68 = arith.addf %67, %66 : vector<1x128xf32>
    %cst_77 = arith.constant 0.000000e+00 : f32
    %69 = vector.broadcast %cst_77 : f32 to vector<1x128xf32>
    %70 = arith.maximumf %68, %69 : vector<1x128xf32>
    %c6_78 = arith.constant 6 : index
    %c0_79 = arith.constant 0 : index
    %71 = vector.load %arg13[%c6_78, %c0_79] : memref<16x128xf32, #tpu.memory_space<vmem>>, vector<1x128xf32>
    tpu.vector_store %arg13[%c6_78, %c0_79], %70 {strides = array<i32>} : memref<16x128xf32, #tpu.memory_space<vmem>>, vector<1x128xf32>,
    %c7 = arith.constant 7 : index
    %c0_80 = arith.constant 0 : index
    %72 = vector.load %arg14[%c7, %c0_80] : memref<16x16xf32, #tpu.memory_space<vmem>>, vector<1x16xf32>
    %c0_81 = arith.constant 0 : index
    %c0_82 = arith.constant 0 : index
    %73 = vector.load %arg13[%c0_81, %c0_82] : memref<16x128xf32, #tpu.memory_space<vmem>>, vector<16x128xf32>
    %cst_83 = arith.constant dense<0.000000e+00> : vector<1x128xf32>
    %74 = tpu.matmul %72, %73, %cst_83 {dimension_numbers = #tpu.dot_dimension_numbers<[1], [0], [0], [1], [0, 0, 1, 1], [], []>} : vector<1x16xf32>, vector<16x128xf32>, vector<1x128xf32> -> vector<1x128xf32>
    %c7_84 = arith.constant 7 : index
    %c0_85 = arith.constant 0 : index
    %75 = vector.load %arg13[%c7_84, %c0_85] : memref<16x128xf32, #tpu.memory_space<vmem>>, vector<1x128xf32>
    %76 = arith.addf %75, %74 : vector<1x128xf32>
    %cst_86 = arith.constant 0.000000e+00 : f32
    %77 = vector.broadcast %cst_86 : f32 to vector<1x128xf32>
    %78 = arith.maximumf %76, %77 : vector<1x128xf32>
    %c7_87 = arith.constant 7 : index
    %c0_88 = arith.constant 0 : index
    %79 = vector.load %arg13[%c7_87, %c0_88] : memref<16x128xf32, #tpu.memory_space<vmem>>, vector<1x128xf32>
    tpu.vector_store %arg13[%c7_87, %c0_88], %78 {strides = array<i32>} : memref<16x128xf32, #tpu.memory_space<vmem>>, vector<1x128xf32>,
    %c8 = arith.constant 8 : index
    %c0_89 = arith.constant 0 : index
    %80 = vector.load %arg14[%c8, %c0_89] : memref<16x16xf32, #tpu.memory_space<vmem>>, vector<1x16xf32>
    %c0_90 = arith.constant 0 : index
    %c0_91 = arith.constant 0 : index
    %81 = vector.load %arg13[%c0_90, %c0_91] : memref<16x128xf32, #tpu.memory_space<vmem>>, vector<16x128xf32>
    %cst_92 = arith.constant dense<0.000000e+00> : vector<1x128xf32>
    %82 = tpu.matmul %80, %81, %cst_92 {dimension_numbers = #tpu.dot_dimension_numbers<[1], [0], [0], [1], [0, 0, 1, 1], [], []>} : vector<1x16xf32>, vector<16x128xf32>, vector<1x128xf32> -> vector<1x128xf32>
    %c8_93 = arith.constant 8 : index
    %c0_94 = arith.constant 0 : index
    %83 = vector.load %arg13[%c8_93, %c0_94] : memref<16x128xf32, #tpu.memory_space<vmem>>, vector<1x128xf32>
    %84 = arith.addf %83, %82 : vector<1x128xf32>
    %cst_95 = arith.constant 0.000000e+00 : f32
    %85 = vector.broadcast %cst_95 : f32 to vector<1x128xf32>
    %86 = arith.maximumf %84, %85 : vector<1x128xf32>
    %c8_96 = arith.constant 8 : index
    %c0_97 = arith.constant 0 : index
    %87 = vector.load %arg13[%c8_96, %c0_97] : memref<16x128xf32, #tpu.memory_space<vmem>>, vector<1x128xf32>
    tpu.vector_store %arg13[%c8_96, %c0_97], %86 {strides = array<i32>} : memref<16x128xf32, #tpu.memory_space<vmem>>, vector<1x128xf32>,
    %c9 = arith.constant 9 : index
    %c0_98 = arith.constant 0 : index
    %88 = vector.load %arg14[%c9, %c0_98] : memref<16x16xf32, #tpu.memory_space<vmem>>, vector<1x16xf32>
    %c0_99 = arith.constant 0 : index
    %c0_100 = arith.constant 0 : index
    %89 = vector.load %arg13[%c0_99, %c0_100] : memref<16x128xf32, #tpu.memory_space<vmem>>, vector<16x128xf32>
    %cst_101 = arith.constant dense<0.000000e+00> : vector<1x128xf32>
    %90 = tpu.matmul %88, %89, %cst_101 {dimension_numbers = #tpu.dot_dimension_numbers<[1], [0], [0], [1], [0, 0, 1, 1], [], []>} : vector<1x16xf32>, vector<16x128xf32>, vector<1x128xf32> -> vector<1x128xf32>
    %c9_102 = arith.constant 9 : index
    %c0_103 = arith.constant 0 : index
    %91 = vector.load %arg13[%c9_102, %c0_103] : memref<16x128xf32, #tpu.memory_space<vmem>>, vector<1x128xf32>
    %92 = arith.addf %91, %90 : vector<1x128xf32>
    %cst_104 = arith.constant 0.000000e+00 : f32
    %93 = vector.broadcast %cst_104 : f32 to vector<1x128xf32>
    %94 = arith.maximumf %92, %93 : vector<1x128xf32>
    %c9_105 = arith.constant 9 : index
    %c0_106 = arith.constant 0 : index
    %95 = vector.load %arg13[%c9_105, %c0_106] : memref<16x128xf32, #tpu.memory_space<vmem>>, vector<1x128xf32>
    tpu.vector_store %arg13[%c9_105, %c0_106], %94 {strides = array<i32>} : memref<16x128xf32, #tpu.memory_space<vmem>>, vector<1x128xf32>,
    %c10 = arith.constant 10 : index
    %c0_107 = arith.constant 0 : index
    %96 = vector.load %arg14[%c10, %c0_107] : memref<16x16xf32, #tpu.memory_space<vmem>>, vector<1x16xf32>
    %c0_108 = arith.constant 0 : index
    %c0_109 = arith.constant 0 : index
    %97 = vector.load %arg13[%c0_108, %c0_109] : memref<16x128xf32, #tpu.memory_space<vmem>>, vector<16x128xf32>
    %cst_110 = arith.constant dense<0.000000e+00> : vector<1x128xf32>
    %98 = tpu.matmul %96, %97, %cst_110 {dimension_numbers = #tpu.dot_dimension_numbers<[1], [0], [0], [1], [0, 0, 1, 1], [], []>} : vector<1x16xf32>, vector<16x128xf32>, vector<1x128xf32> -> vector<1x128xf32>
    %c10_111 = arith.constant 10 : index
    %c0_112 = arith.constant 0 : index
    %99 = vector.load %arg13[%c10_111, %c0_112] : memref<16x128xf32, #tpu.memory_space<vmem>>, vector<1x128xf32>
    %100 = arith.addf %99, %98 : vector<1x128xf32>
    %cst_113 = arith.constant 0.000000e+00 : f32
    %101 = vector.broadcast %cst_113 : f32 to vector<1x128xf32>
    %102 = arith.maximumf %100, %101 : vector<1x128xf32>
    %c10_114 = arith.constant 10 : index
    %c0_115 = arith.constant 0 : index
    %103 = vector.load %arg13[%c10_114, %c0_115] : memref<16x128xf32, #tpu.memory_space<vmem>>, vector<1x128xf32>
    tpu.vector_store %arg13[%c10_114, %c0_115], %102 {strides = array<i32>} : memref<16x128xf32, #tpu.memory_space<vmem>>, vector<1x128xf32>,
    %c11 = arith.constant 11 : index
    %c0_116 = arith.constant 0 : index
    %104 = vector.load %arg14[%c11, %c0_116] : memref<16x16xf32, #tpu.memory_space<vmem>>, vector<1x16xf32>
    %c0_117 = arith.constant 0 : index
    %c0_118 = arith.constant 0 : index
    %105 = vector.load %arg13[%c0_117, %c0_118] : memref<16x128xf32, #tpu.memory_space<vmem>>, vector<16x128xf32>
    %cst_119 = arith.constant dense<0.000000e+00> : vector<1x128xf32>
    %106 = tpu.matmul %104, %105, %cst_119 {dimension_numbers = #tpu.dot_dimension_numbers<[1], [0], [0], [1], [0, 0, 1, 1], [], []>} : vector<1x16xf32>, vector<16x128xf32>, vector<1x128xf32> -> vector<1x128xf32>
    %c11_120 = arith.constant 11 : index
    %c0_121 = arith.constant 0 : index
    %107 = vector.load %arg13[%c11_120, %c0_121] : memref<16x128xf32, #tpu.memory_space<vmem>>, vector<1x128xf32>
    %108 = arith.addf %107, %106 : vector<1x128xf32>
    %cst_122 = arith.constant 0.000000e+00 : f32
    %109 = vector.broadcast %cst_122 : f32 to vector<1x128xf32>
    %110 = arith.maximumf %108, %109 : vector<1x128xf32>
    %c11_123 = arith.constant 11 : index
    %c0_124 = arith.constant 0 : index
    %111 = vector.load %arg13[%c11_123, %c0_124] : memref<16x128xf32, #tpu.memory_space<vmem>>, vector<1x128xf32>
    tpu.vector_store %arg13[%c11_123, %c0_124], %110 {strides = array<i32>} : memref<16x128xf32, #tpu.memory_space<vmem>>, vector<1x128xf32>,
    %c12 = arith.constant 12 : index
    %c0_125 = arith.constant 0 : index
    %112 = vector.load %arg14[%c12, %c0_125] : memref<16x16xf32, #tpu.memory_space<vmem>>, vector<1x16xf32>
    %c0_126 = arith.constant 0 : index
    %c0_127 = arith.constant 0 : index
    %113 = vector.load %arg13[%c0_126, %c0_127] : memref<16x128xf32, #tpu.memory_space<vmem>>, vector<16x128xf32>
    %cst_128 = arith.constant dense<0.000000e+00> : vector<1x128xf32>
    %114 = tpu.matmul %112, %113, %cst_128 {dimension_numbers = #tpu.dot_dimension_numbers<[1], [0], [0], [1], [0, 0, 1, 1], [], []>} : vector<1x16xf32>, vector<16x128xf32>, vector<1x128xf32> -> vector<1x128xf32>
    %c12_129 = arith.constant 12 : index
    %c0_130 = arith.constant 0 : index
    %115 = vector.load %arg13[%c12_129, %c0_130] : memref<16x128xf32, #tpu.memory_space<vmem>>, vector<1x128xf32>
    %116 = arith.addf %115, %114 : vector<1x128xf32>
    %cst_131 = arith.constant 0.000000e+00 : f32
    %117 = vector.broadcast %cst_131 : f32 to vector<1x128xf32>
    %118 = arith.maximumf %116, %117 : vector<1x128xf32>
    %c12_132 = arith.constant 12 : index
    %c0_133 = arith.constant 0 : index
    %119 = vector.load %arg13[%c12_132, %c0_133] : memref<16x128xf32, #tpu.memory_space<vmem>>, vector<1x128xf32>
    tpu.vector_store %arg13[%c12_132, %c0_133], %118 {strides = array<i32>} : memref<16x128xf32, #tpu.memory_space<vmem>>, vector<1x128xf32>,
    %c13 = arith.constant 13 : index
    %c0_134 = arith.constant 0 : index
    %120 = vector.load %arg14[%c13, %c0_134] : memref<16x16xf32, #tpu.memory_space<vmem>>, vector<1x16xf32>
    %c0_135 = arith.constant 0 : index
    %c0_136 = arith.constant 0 : index
    %121 = vector.load %arg13[%c0_135, %c0_136] : memref<16x128xf32, #tpu.memory_space<vmem>>, vector<16x128xf32>
    %cst_137 = arith.constant dense<0.000000e+00> : vector<1x128xf32>
    %122 = tpu.matmul %120, %121, %cst_137 {dimension_numbers = #tpu.dot_dimension_numbers<[1], [0], [0], [1], [0, 0, 1, 1], [], []>} : vector<1x16xf32>, vector<16x128xf32>, vector<1x128xf32> -> vector<1x128xf32>
    %c13_138 = arith.constant 13 : index
    %c0_139 = arith.constant 0 : index
    %123 = vector.load %arg13[%c13_138, %c0_139] : memref<16x128xf32, #tpu.memory_space<vmem>>, vector<1x128xf32>
    %124 = arith.addf %123, %122 : vector<1x128xf32>
    %cst_140 = arith.constant 0.000000e+00 : f32
    %125 = vector.broadcast %cst_140 : f32 to vector<1x128xf32>
    %126 = arith.maximumf %124, %125 : vector<1x128xf32>
    %c13_141 = arith.constant 13 : index
    %c0_142 = arith.constant 0 : index
    %127 = vector.load %arg13[%c13_141, %c0_142] : memref<16x128xf32, #tpu.memory_space<vmem>>, vector<1x128xf32>
    tpu.vector_store %arg13[%c13_141, %c0_142], %126 {strides = array<i32>} : memref<16x128xf32, #tpu.memory_space<vmem>>, vector<1x128xf32>,
    %c14 = arith.constant 14 : index
    %c0_143 = arith.constant 0 : index
    %128 = vector.load %arg14[%c14, %c0_143] : memref<16x16xf32, #tpu.memory_space<vmem>>, vector<1x16xf32>
    %c0_144 = arith.constant 0 : index
    %c0_145 = arith.constant 0 : index
    %129 = vector.load %arg13[%c0_144, %c0_145] : memref<16x128xf32, #tpu.memory_space<vmem>>, vector<16x128xf32>
    %cst_146 = arith.constant dense<0.000000e+00> : vector<1x128xf32>
    %130 = tpu.matmul %128, %129, %cst_146 {dimension_numbers = #tpu.dot_dimension_numbers<[1], [0], [0], [1], [0, 0, 1, 1], [], []>} : vector<1x16xf32>, vector<16x128xf32>, vector<1x128xf32> -> vector<1x128xf32>
    %c14_147 = arith.constant 14 : index
    %c0_148 = arith.constant 0 : index
    %131 = vector.load %arg13[%c14_147, %c0_148] : memref<16x128xf32, #tpu.memory_space<vmem>>, vector<1x128xf32>
    %132 = arith.addf %131, %130 : vector<1x128xf32>
    %cst_149 = arith.constant 0.000000e+00 : f32
    %133 = vector.broadcast %cst_149 : f32 to vector<1x128xf32>
    %134 = arith.maximumf %132, %133 : vector<1x128xf32>
    %c14_150 = arith.constant 14 : index
    %c0_151 = arith.constant 0 : index
    %135 = vector.load %arg13[%c14_150, %c0_151] : memref<16x128xf32, #tpu.memory_space<vmem>>, vector<1x128xf32>
    tpu.vector_store %arg13[%c14_150, %c0_151], %134 {strides = array<i32>} : memref<16x128xf32, #tpu.memory_space<vmem>>, vector<1x128xf32>,
    %c15 = arith.constant 15 : index
    %c0_152 = arith.constant 0 : index
    %136 = vector.load %arg14[%c15, %c0_152] : memref<16x16xf32, #tpu.memory_space<vmem>>, vector<1x16xf32>
    %c0_153 = arith.constant 0 : index
    %c0_154 = arith.constant 0 : index
    %137 = vector.load %arg13[%c0_153, %c0_154] : memref<16x128xf32, #tpu.memory_space<vmem>>, vector<16x128xf32>
    %cst_155 = arith.constant dense<0.000000e+00> : vector<1x128xf32>
    %138 = tpu.matmul %136, %137, %cst_155 {dimension_numbers = #tpu.dot_dimension_numbers<[1], [0], [0], [1], [0, 0, 1, 1], [], []>} : vector<1x16xf32>, vector<16x128xf32>, vector<1x128xf32> -> vector<1x128xf32>
    %c15_156 = arith.constant 15 : index
    %c0_157 = arith.constant 0 : index
    %139 = vector.load %arg13[%c15_156, %c0_157] : memref<16x128xf32, #tpu.memory_space<vmem>>, vector<1x128xf32>
    %140 = arith.addf %139, %138 : vector<1x128xf32>
    %cst_158 = arith.constant 0.000000e+00 : f32
    %141 = vector.broadcast %cst_158 : f32 to vector<1x128xf32>
    %142 = arith.maximumf %140, %141 : vector<1x128xf32>
    %c15_159 = arith.constant 15 : index
    %c0_160 = arith.constant 0 : index
    %143 = vector.load %arg13[%c15_159, %c0_160] : memref<16x128xf32, #tpu.memory_space<vmem>>, vector<1x128xf32>
    tpu.vector_store %arg13[%c15_159, %c0_160], %142 {strides = array<i32>} : memref<16x128xf32, #tpu.memory_space<vmem>>, vector<1x128xf32>,
    %c0_161 = arith.constant 0 : index
    %c0_162 = arith.constant 0 : index
    %144 = vector.load %arg13[%c0_161, %c0_162] : memref<16x128xf32, #tpu.memory_space<vmem>>, vector<16x128xf32>
    %c0_163 = arith.constant 0 : index
    %c0_164 = arith.constant 0 : index
    %145 = vector.load %arg5[%c0_163, %c0_164] : memref<128x128xf32, #tpu.memory_space<vmem>>, vector<128x128xf32>
    %cst_165 = arith.constant dense<0.000000e+00> : vector<16x128xf32>
    %146 = tpu.matmul %144, %145, %cst_165 {dimension_numbers = #tpu.dot_dimension_numbers<[1], [0], [0], [1], [0, 0, 1, 1], [], []>} : vector<16x128xf32>, vector<128x128xf32>, vector<16x128xf32> -> vector<16x128xf32>
    %c0_166 = arith.constant 0 : index
    %c0_167 = arith.constant 0 : index
    %147 = vector.load %arg6[%c0_166, %c0_167] : memref<1x128xf32, #tpu.memory_space<vmem>>, vector<1x128xf32>
    %148 = vector.broadcast %147 : vector<1x128xf32> to vector<16x128xf32>
    %149 = arith.addf %146, %148 : vector<16x128xf32>
    %cst_168 = arith.constant 0.000000e+00 : f32
    %150 = vector.broadcast %cst_168 : f32 to vector<16x128xf32>
    %151 = arith.maximumf %149, %150 : vector<16x128xf32>
    %c0_169 = arith.constant 0 : index
    %c0_170 = arith.constant 0 : index
    %152 = vector.load %arg14[%c0_169, %c0_170] : memref<16x16xf32, #tpu.memory_space<vmem>>, vector<16x16xf32>
    %cst_171 = arith.constant dense<0.000000e+00> : vector<16x128xf32>
    %153 = tpu.matmul %152, %151, %cst_171 {dimension_numbers = #tpu.dot_dimension_numbers<[1], [0], [0], [1], [0, 0, 1, 1], [], []>} : vector<16x16xf32>, vector<16x128xf32>, vector<16x128xf32> -> vector<16x128xf32>
    %154 = arith.addf %151, %153 : vector<16x128xf32>
    %cst_172 = arith.constant 0.000000e+00 : f32
    %155 = vector.broadcast %cst_172 : f32 to vector<16x128xf32>
    %156 = arith.maximumf %154, %155 : vector<16x128xf32>
    %c0_173 = arith.constant 0 : index
    %c0_174 = arith.constant 0 : index
    %157 = vector.load %arg10[%c0_173, %c0_174] : memref<16x128xf32, #tpu.memory_space<vmem>>, vector<16x128xf32>
    tpu.vector_store %arg10[%c0_173, %c0_174], %156 {strides = array<i32>} : memref<16x128xf32, #tpu.memory_space<vmem>>, vector<16x128xf32>,
    %c0_175 = arith.constant 0 : index
    %c0_176 = arith.constant 0 : index
    %158 = vector.load %arg7[%c0_175, %c0_176] : memref<128x128xf32, #tpu.memory_space<vmem>>, vector<128x128xf32>
    %cst_177 = arith.constant dense<0.000000e+00> : vector<16x128xf32>
    %159 = tpu.matmul %156, %158, %cst_177 {dimension_numbers = #tpu.dot_dimension_numbers<[1], [0], [0], [1], [0, 0, 1, 1], [], []>} : vector<16x128xf32>, vector<128x128xf32>, vector<16x128xf32> -> vector<16x128xf32>
    %c0_178 = arith.constant 0 : index
    %c0_179 = arith.constant 0 : index
    %160 = vector.load %arg9[%c0_178, %c0_179] : memref<1x128xf32, #tpu.memory_space<vmem>>, vector<1x128xf32>
    %161 = vector.broadcast %160 : vector<1x128xf32> to vector<16x128xf32>
    %162 = arith.addf %159, %161 : vector<16x128xf32>
    %c0_180 = arith.constant 0 : index
    %c0_181 = arith.constant 0 : index
    %163 = vector.load %arg11[%c0_180, %c0_181] : memref<16x128xf32, #tpu.memory_space<vmem>>, vector<16x128xf32>
    tpu.vector_store %arg11[%c0_180, %c0_181], %162 {strides = array<i32>} : memref<16x128xf32, #tpu.memory_space<vmem>>, vector<16x128xf32>,
    %c0_182 = arith.constant 0 : index
    %c0_183 = arith.constant 0 : index
    %164 = vector.load %arg8[%c0_182, %c0_183] : memref<128x128xf32, #tpu.memory_space<vmem>>, vector<128x128xf32>
    %cst_184 = arith.constant dense<0.000000e+00> : vector<16x128xf32>
    %165 = tpu.matmul %156, %164, %cst_184 {dimension_numbers = #tpu.dot_dimension_numbers<[1], [0], [0], [1], [0, 0, 1, 1], [], []>} : vector<16x128xf32>, vector<128x128xf32>, vector<16x128xf32> -> vector<16x128xf32>
    %c0_185 = arith.constant 0 : index
    %c0_186 = arith.constant 0 : index
    %166 = vector.load %arg12[%c0_185, %c0_186] : memref<16x128xf32, #tpu.memory_space<vmem>>, vector<16x128xf32>
    tpu.vector_store %arg12[%c0_185, %c0_186], %165 {strides = array<i32>} : memref<16x128xf32, #tpu.memory_space<vmem>>, vector<16x128xf32>,
    return
  }
  func.func @transform_0(%arg0: i32) -> (i32, i32) {
    %c0_i32 = arith.constant 0 : i32
    %c0_i32_0 = arith.constant 0 : i32
    %c0_i32_1 = arith.constant 0 : i32
    return %c0_i32, %c0_i32_0 : i32, i32
  }
  func.func @transform_1(%arg0: i32) -> (i32, i32) {
    %c0_i32 = arith.constant 0 : i32
    %c0_i32_0 = arith.constant 0 : i32
    %c0_i32_1 = arith.constant 0 : i32
    return %c0_i32, %c0_i32_0 : i32, i32
  }
  func.func @transform_2(%arg0: i32) -> (i32, i32) {
    %c0_i32 = arith.constant 0 : i32
    %c0_i32_0 = arith.constant 0 : i32
    %c0_i32_1 = arith.constant 0 : i32
    return %c0_i32, %c0_i32_0 : i32, i32
  }
  func.func @transform_3(%arg0: i32) -> (i32, i32) {
    %c0_i32 = arith.constant 0 : i32
    %c0_i32_0 = arith.constant 0 : i32
    %c0_i32_1 = arith.constant 0 : i32
    return %c0_i32, %c0_i32_0 : i32, i32
  }
  func.func @transform_4(%arg0: i32) -> (i32, i32) {
    %c0_i32 = arith.constant 0 : i32
    %c0_i32_0 = arith.constant 0 : i32
    %c0_i32_1 = arith.constant 0 : i32
    return %c0_i32, %c0_i32_0 : i32, i32
  }
  func.func @transform_5(%arg0: i32) -> (i32, i32) {
    %c0_i32 = arith.constant 0 : i32
    %c0_i32_0 = arith.constant 0 : i32
    %c0_i32_1 = arith.constant 0 : i32
    return %c0_i32, %c0_i32_0 : i32, i32
  }
  func.func @transform_6(%arg0: i32) -> (i32, i32) {
    %c0_i32 = arith.constant 0 : i32
    %c0_i32_0 = arith.constant 0 : i32
    %c0_i32_1 = arith.constant 0 : i32
    return %c0_i32, %c0_i32_0 : i32, i32
  }
  func.func @transform_7(%arg0: i32) -> (i32, i32) {
    %c0_i32 = arith.constant 0 : i32
    %c0_i32_0 = arith.constant 0 : i32
    %c0_i32_1 = arith.constant 0 : i32
    return %c0_i32, %c0_i32_0 : i32, i32
  }
  func.func @transform_8(%arg0: i32) -> (i32, i32) {
    %c0_i32 = arith.constant 0 : i32
    %c0_i32_0 = arith.constant 0 : i32
    %c0_i32_1 = arith.constant 0 : i32
    return %c0_i32, %c0_i32_0 : i32, i32
  }
  func.func @transform_9(%arg0: i32) -> (i32, i32) {
    %c0_i32 = arith.constant 0 : i32
    %c0_i32_0 = arith.constant 0 : i32
    %c0_i32_1 = arith.constant 0 : i32
    return %c0_i32, %c0_i32_0 : i32, i32
  }
  func.func @transform_10(%arg0: i32) -> (i32, i32) {
    %c0_i32 = arith.constant 0 : i32
    %c0_i32_0 = arith.constant 0 : i32
    %c0_i32_1 = arith.constant 0 : i32
    return %c0_i32, %c0_i32_0 : i32, i32
  }
  func.func @transform_11(%arg0: i32) -> (i32, i32) {
    %c0_i32 = arith.constant 0 : i32
    %c0_i32_0 = arith.constant 0 : i32
    %c0_i32_1 = arith.constant 0 : i32
    return %c0_i32, %c0_i32_0 : i32, i32
  }
}

</mosaic_0001>

<llo_original>
// kernel: tpu_custom_call.1
$region0: #{tpu_custom_call.1}
  #allocation0 [shape = 'u32[]', space=smem, size = 0x4, offset = 0x4, fixed_abs, tag = 'smem constant byte address 0x4 - core index']
  #allocation1 [shape = 'u32[144,128]{1,0:T(1,128)}', space=vmem, size = 0x12000, scoped, tag = 'internal scratch']
  #allocation2 [shape = 'f32[16,128]{1,0:T(8,128)}', space=vmem, size = 0x2000, scoped, tag = 'scratch operand']
  #allocation3 [shape = 'f32[16,16]{1,0:T(8,128)}', space=vmem, size = 0x2000, scoped, tag = 'scratch operand']
  %s0 = inlined_call_operand.hbm [shape: f32[16,256], index: 0, kind: input, shape index: {}]
  %s1 = inlined_call_operand.hbm [shape: f32[16,16], index: 1, kind: input, shape index: {}]
  %s2 = inlined_call_operand.hbm [shape: f32[256,128], index: 2, kind: input, shape index: {}]
  %s3 = inlined_call_operand.vmem [shape: f32[1,128], index: 3, kind: input, shape index: {}]
  %s4 = inlined_call_operand.hbm [shape: f32[128,128], index: 4, kind: input, shape index: {}]
  %s5 = inlined_call_operand.vmem [shape: f32[1,128], index: 5, kind: input, shape index: {}]
  %s6 = inlined_call_operand.hbm [shape: f32[128,128], index: 6, kind: input, shape index: {}]
  %s7 = inlined_call_operand.hbm [shape: f32[128,128], index: 7, kind: input, shape index: {}]
  %s8 = inlined_call_operand.vmem [shape: f32[1,128], index: 8, kind: input, shape index: {}]
  %s9 = inlined_call_operand.hbm [shape: f32[16,128], index: 9, kind: output, shape index: {0}]
  %s10 = inlined_call_operand.hbm [shape: f32[16,128], index: 10, kind: output, shape index: {1}]
  %s11 = inlined_call_operand.hbm [shape: f32[16,128], index: 11, kind: output, shape index: {2}]
  %12 = xla_tuple %s9, %s10, %s11
  %s13 = sld [smem:[#allocation0]]
  $region86: #{tpu_custom_call.1} parent=0
    _
  %s15 = ssub.s32 1, %s13
  %s16 = scalar_select 0, %s15, %s13
  $region1: #{tpu_custom_call.1} parent=0
    #allocation4 [shape = 'u8[16384]{0}', space=vmem, size = 0x4000, scoped, tag = 'input window, operand 0, single buffered']
    #allocation5 [shape = 's32[1]{0}', space=sflag, size = 0x4, scoped, tag = 'scoped memory for tpu_custom_call.1']
    #allocation6 [shape = 's32[1]{0}', space=sflag, size = 0x4, scoped, tag = 'scoped memory for tpu_custom_call.1']
    #allocation7 [shape = 'u8[8192]{0}', space=vmem, size = 0x2000, scoped, tag = 'input window, operand 1, single buffered']
    #allocation8 [shape = 's32[1]{0}', space=sflag, size = 0x4, scoped, tag = 'scoped memory for tpu_custom_call.1']
    #allocation9 [shape = 'u8[131072]{0}', space=vmem, size = 0x20000, scoped, tag = 'input window, operand 2, single buffered']
    #allocation10 [shape = 'u8[65536]{0}', space=vmem, size = 0x10000, scoped, tag = 'input window, operand 4, single buffered']
    #allocation11 [shape = 's32[1]{0}', space=sflag, size = 0x4, scoped, tag = 'scoped memory for tpu_custom_call.1']
    #allocation12 [shape = 'u8[65536]{0}', space=vmem, size = 0x10000, scoped, tag = 'input window, operand 6, single buffered']
    #allocation13 [shape = 'u8[65536]{0}', space=vmem, size = 0x10000, scoped, tag = 'input window, operand 7, single buffered']
    #allocation14 [shape = 's32[1]{0}', space=sflag, size = 0x4, scoped, tag = 'scoped memory for tpu_custom_call.1']
    #allocation15 [shape = 'u8[8192]{0}', space=vmem, size = 0x2000, scoped, tag = 'output window, operand 0, single buffered']
    #allocation16 [shape = 'u8[8192]{0}', space=vmem, size = 0x2000, scoped, tag = 'output window, operand 1, single buffered']
    #allocation17 [shape = 's32[1]{0}', space=sflag, size = 0x4, scoped, tag = 'scoped memory for tpu_custom_call.1']
    #allocation18 [shape = 'u8[8192]{0}', space=vmem, size = 0x2000, scoped, tag = 'output window, operand 2, single buffered']
    %17 = vsyncpa [#allocation5], 0
    %18 = vsyncpa [#allocation8], 0
    %19 = vsyncpa [#allocation11], 0
    %20 = vsyncpa [#allocation14], 0
    %21 = vsyncpa [#allocation6], 0
    %22 = vsyncpa [#allocation17], 0
    // Predicated region
    $region2: #{tpu_custom_call.1} parent=1 // pred_check
      _
    $region3: #{tpu_custom_call.1} parent=1 // pred_check_branch
      %24 = sbr.rel (0) target = $region5
    $region4: #{tpu_custom_call.1} parent=1 // pred_region
      %s26 = ssub.s32 512, 512
      %27 = vsyncadd [#allocation5], %s26
      %s28 = sshll.u32 [#allocation4], 4
      %s29 = int_to_ptr.vmem [resolvable:$true] %s28
      %34 = dma.hbm_to_vmem [thread:$0]  %s0, 512, %s29, [#allocation5], 256, 256, 16
    $region5: #{tpu_custom_call.1} parent=1 // pred_fallthru
      _
    // Predicated region
    $region6: #{tpu_custom_call.1} parent=1 // pred_check
      _
    $region7: #{tpu_custom_call.1} parent=1 // pred_check_branch
      %36 = sbr.rel (0) target = $region9
    $region8: #{tpu_custom_call.1} parent=1 // pred_region
      %s38 = ssub.s32 256, 256
      %39 = vsyncadd [#allocation8], %s38
      %s40 = sshll.u32 [#allocation7], 4
      %s41 = int_to_ptr.vmem [resolvable:$true] %s40
      %46 = dma.hbm_to_vmem [thread:$0]  %s1, 256, %s41, [#allocation8], 128, 128, 8
    $region9: #{tpu_custom_call.1} parent=1 // pred_fallthru
      _
    // Predicated region
    $region10: #{tpu_custom_call.1} parent=1 // pred_check
      _
    $region11: #{tpu_custom_call.1} parent=1 // pred_check_branch
      %48 = sbr.rel (0) target = $region13
    $region12: #{tpu_custom_call.1} parent=1 // pred_region
      %s50 = ssub.s32 4096, 4096
      %51 = vsyncadd [#allocation8], %s50
      %s52 = sshll.u32 [#allocation9], 4
      %s53 = int_to_ptr.vmem [resolvable:$true] %s52
      %58 = dma.hbm_to_vmem [thread:$0]  %s2, 4096, %s53, [#allocation8], 128, 128, 8
    $region13: #{tpu_custom_call.1} parent=1 // pred_fallthru
      _
    // Predicated region
    $region14: #{tpu_custom_call.1} parent=1 // pred_check
      _
    $region15: #{tpu_custom_call.1} parent=1 // pred_check_branch
      %60 = sbr.rel (0) target = $region17
    $region16: #{tpu_custom_call.1} parent=1 // pred_region
      _
    $region17: #{tpu_custom_call.1} parent=1 // pred_fallthru
      _
    // Predicated region
    $region18: #{tpu_custom_call.1} parent=1 // pred_check
      _
    $region19: #{tpu_custom_call.1} parent=1 // pred_check_branch
      %62 = sbr.rel (0) target = $region21
    $region20: #{tpu_custom_call.1} parent=1 // pred_region
      %s64 = ssub.s32 2048, 2048
      %65 = vsyncadd [#allocation11], %s64
      %s66 = sshll.u32 [#allocation10], 4
      %s67 = int_to_ptr.vmem [resolvable:$true] %s66
      %72 = dma.hbm_to_vmem [thread:$0]  %s4, 2048, %s67, [#allocation11], 128, 128, 8
    $region21: #{tpu_custom_call.1} parent=1 // pred_fallthru
      _
    // Predicated region
    $region22: #{tpu_custom_call.1} parent=1 // pred_check
      _
    $region23: #{tpu_custom_call.1} parent=1 // pred_check_branch
      %74 = sbr.rel (0) target = $region25
    $region24: #{tpu_custom_call.1} parent=1 // pred_region
      _
    $region25: #{tpu_custom_call.1} parent=1 // pred_fallthru
      _
    // Predicated region
    $region26: #{tpu_custom_call.1} parent=1 // pred_check
      _
    $region27: #{tpu_custom_call.1} parent=1 // pred_check_branch
      %76 = sbr.rel (0) target = $region29
    $region28: #{tpu_custom_call.1} parent=1 // pred_region
      %s78 = ssub.s32 2048, 2048
      %79 = vsyncadd [#allocation11], %s78
      %s80 = sshll.u32 [#allocation12], 4
      %s81 = int_to_ptr.vmem [resolvable:$true] %s80
      %86 = dma.hbm_to_vmem [thread:$0]  %s6, 2048, %s81, [#allocation11], 128, 128, 8
    $region29: #{tpu_custom_call.1} parent=1 // pred_fallthru
      _
    // Predicated region
    $region30: #{tpu_custom_call.1} parent=1 // pred_check
      _
    $region31: #{tpu_custom_call.1} parent=1 // pred_check_branch
      %88 = sbr.rel (0) target = $region33
    $region32: #{tpu_custom_call.1} parent=1 // pred_region
      %s90 = ssub.s32 2048, 2048
      %91 = vsyncadd [#allocation14], %s90
      %s92 = sshll.u32 [#allocation13], 4
      %s93 = int_to_ptr.vmem [resolvable:$true] %s92
      %98 = dma.hbm_to_vmem [thread:$0]  %s7, 2048, %s93, [#allocation14], 128, 128, 8
    $region33: #{tpu_custom_call.1} parent=1 // pred_fallthru
      _
    // Predicated region
    $region34: #{tpu_custom_call.1} parent=1 // pred_check
      _
    $region35: #{tpu_custom_call.1} parent=1 // pred_check_branch
      %100 = sbr.rel (0) target = $region37
    $region36: #{tpu_custom_call.1} parent=1 // pred_region
      _
    $region37: #{tpu_custom_call.1} parent=1 // pred_fallthru
      _
    // Predicated region
    $region38: #{tpu_custom_call.1} parent=1 // pred_check
      _
    $region39: #{tpu_custom_call.1} parent=1 // pred_check_branch
      %102 = sbr.rel (0) target = $region41
    $region40: #{tpu_custom_call.1} parent=1 // pred_region
      %103 = dma.done [#allocation5], 512
    $region41: #{tpu_custom_call.1} parent=1 // pred_fallthru
      _
    // Predicated region
    $region42: #{tpu_custom_call.1} parent=1 // pred_check
      _
    $region43: #{tpu_custom_call.1} parent=1 // pred_check_branch
      %105 = sbr.rel (0) target = $region45
    $region44: #{tpu_custom_call.1} parent=1 // pred_region
      %106 = dma.done [#allocation8], 256
    $region45: #{tpu_custom_call.1} parent=1 // pred_fallthru
      _
    // Predicated region
    $region46: #{tpu_custom_call.1} parent=1 // pred_check
      _
    $region47: #{tpu_custom_call.1} parent=1 // pred_check_branch
      %108 = sbr.rel (0) target = $region49
    $region48: #{tpu_custom_call.1} parent=1 // pred_region
      %109 = dma.done [#allocation8], 4096
    $region49: #{tpu_custom_call.1} parent=1 // pred_fallthru
      _
    // Predicated region
    $region50: #{tpu_custom_call.1} parent=1 // pred_check
      _
    $region51: #{tpu_custom_call.1} parent=1 // pred_check_branch
      %111 = sbr.rel (0) target = $region53
    $region52: #{tpu_custom_call.1} parent=1 // pred_region
      %112 = dma.done [#allocation11], 2048
    $region53: #{tpu_custom_call.1} parent=1 // pred_fallthru
      _
    // Predicated region
    $region54: #{tpu_custom_call.1} parent=1 // pred_check
      _
    $region55: #{tpu_custom_call.1} parent=1 // pred_check_branch
      %114 = sbr.rel (0) target = $region57
    $region56: #{tpu_custom_call.1} parent=1 // pred_region
      %115 = dma.done [#allocation11], 2048
    $region57: #{tpu_custom_call.1} parent=1 // pred_fallthru
      _
    // Predicated region
    $region58: #{tpu_custom_call.1} parent=1 // pred_check
      _
    $region59: #{tpu_custom_call.1} parent=1 // pred_check_branch
      %117 = sbr.rel (0) target = $region61
    $region60: #{tpu_custom_call.1} parent=1 // pred_region
      %118 = dma.done [#allocation14], 2048
    $region61: #{tpu_custom_call.1} parent=1 // pred_fallthru
      _
    %v119 = vld [vmem:[#allocation7] sm:$0xff]
    %v120 = vld [vmem:[#allocation7 + $0x8] sm:$0xff]
    %vm121 = vcmp.gt.f32.partialorder %v119, 0.0
    %vm122 = vcmp.gt.f32.partialorder %v120, 0.0
    %v123 = vsel %vm121, %v119, 0.0
    %v124 = vsel %vm122, %v120, 0.0
    %vm125 = vcmask 130048
    %126 = vst.msk [vmem:[#allocation3] sm:$0xff] %vm125, %v123
    %127 = vst.msk [vmem:[#allocation3 + $0x8] sm:$0xff] %vm125, %v124
    %v128 = vld [vmem:[#allocation4] sm:$0xff]
    %v129 = vld [vmem:[#allocation4 + $0x8] sm:$0xff]
    %v130 = vld [vmem:[#allocation4 + $0x10] sm:$0xff]
    %v131 = vld [vmem:[#allocation4 + $0x18] sm:$0xff]
    %v132 = vld [vmem:[#allocation9] sm:$0xff]
    %v133 = vld [vmem:[#allocation9 + $0x8] sm:$0xff]
    %v134 = vld [vmem:[#allocation9 + $0x10] sm:$0xff]
    %v135 = vld [vmem:[#allocation9 + $0x18] sm:$0xff]
    %v136 = vld [vmem:[#allocation9 + $0x20] sm:$0xff]
    %v137 = vld [vmem:[#allocation9 + $0x28] sm:$0xff]
    %v138 = vld [vmem:[#allocation9 + $0x30] sm:$0xff]
    %v139 = vld [vmem:[#allocation9 + $0x38] sm:$0xff]
    %v140 = vld [vmem:[#allocation9 + $0x40] sm:$0xff]
    %v141 = vld [vmem:[#allocation9 + $0x48] sm:$0xff]
    %v142 = vld [vmem:[#allocation9 + $0x50] sm:$0xff]
    %v143 = vld [vmem:[#allocation9 + $0x58] sm:$0xff]
    %v144 = vld [vmem:[#allocation9 + $0x60] sm:$0xff]
    %v145 = vld [vmem:[#allocation9 + $0x68] sm:$0xff]
    %v146 = vld [vmem:[#allocation9 + $0x70] sm:$0xff]
    %v147 = vld [vmem:[#allocation9 + $0x78] sm:$0xff]
    %v148 = vld [vmem:[#allocation9 + $0x80] sm:$0xff]
    %v149 = vld [vmem:[#allocation9 + $0x88] sm:$0xff]
    %v150 = vld [vmem:[#allocation9 + $0x90] sm:$0xff]
    %v151 = vld [vmem:[#allocation9 + $0x98] sm:$0xff]
    %v152 = vld [vmem:[#allocation9 + $0xa0] sm:$0xff]
    %v153 = vld [vmem:[#allocation9 + $0xa8] sm:$0xff]
    %v154 = vld [vmem:[#allocation9 + $0xb0] sm:$0xff]
    %v155 = vld [vmem:[#allocation9 + $0xb8] sm:$0xff]
    %v156 = vld [vmem:[#allocation9 + $0xc0] sm:$0xff]
    %v157 = vld [vmem:[#allocation9 + $0xc8] sm:$0xff]
    %v158 = vld [vmem:[#allocation9 + $0xd0] sm:$0xff]
    %v159 = vld [vmem:[#allocation9 + $0xd8] sm:$0xff]
    %v160 = vld [vmem:[#allocation9 + $0xe0] sm:$0xff]
    %v161 = vld [vmem:[#allocation9 + $0xe8] sm:$0xff]
    %v162 = vld [vmem:[#allocation9 + $0xf0] sm:$0xff]
    %v163 = vld [vmem:[#allocation9 + $0xf8] sm:$0xff]
    %v164 = vld [vmem:[%s3] sm:$0x1]
    %v166 = vlaneseq
    %v167 = vshrl.u32 %v166, 7
    %v168 = vsub.s32 0, %v167
    %v169 = vrot.slane %v164, %v168
    %171 = vmatprep.subr.mxu0 0.0
    %172 = vmatpush1.msra.mxu0 %v132
    %173 = vmatprep.subr.mxu0 0.0
    %174 = vmatpush1.msra.mxu0 %v133
    %175 = vmatprep.subr.mxu0 0.0
    %176 = vmatpush1.msra.mxu0 %v134
    %177 = vmatprep.subr.mxu0 0.0
    %178 = vmatpush1.msra.mxu0 %v135
    %179 = vmatprep.subr.mxu0 0.0
    %180 = vmatpush1.msra.mxu0 %v136
    %181 = vmatprep.subr.mxu0 0.0
    %182 = vmatpush1.msra.mxu0 %v137
    %183 = vmatprep.subr.mxu0 0.0
    %184 = vmatpush1.msra.mxu0 %v138
    %185 = vmatprep.subr.mxu0 0.0
    %186 = vmatpush1.msra.mxu0 %v139
    %187 = vmatprep.subr.mxu0 0.0
    %188 = vmatpush1.msra.mxu0 %v140
    %189 = vmatprep.subr.mxu0 0.0
    %190 = vmatpush1.msra.mxu0 %v141
    %191 = vmatprep.subr.mxu0 0.0
    %192 = vmatpush1.msra.mxu0 %v142
    %193 = vmatprep.subr.mxu0 0.0
    %194 = vmatpush1.msra.mxu0 %v143
    %195 = vmatprep.subr.mxu0 0.0
    %196 = vmatpush1.msra.mxu0 %v144
    %197 = vmatprep.subr.mxu0 0.0
    %198 = vmatpush1.msra.mxu0 %v145
    %199 = vmatprep.subr.mxu0 0.0
    %200 = vmatpush1.msra.mxu0 %v146
    %201 = vmatprep.subr.mxu0 0.0
    %202 = vmatpush1.msra.mxu0 %v147
    %203 = vmatprep.subr.mxu0 0.0
    %204 = vmatpush1.msra.mxu0 %v148
    %205 = vmatprep.subr.mxu0 0.0
    %206 = vmatpush1.msra.mxu0 %v149
    %207 = vmatprep.subr.mxu0 0.0
    %208 = vmatpush1.msra.mxu0 %v150
    %209 = vmatprep.subr.mxu0 0.0
    %210 = vmatpush1.msra.mxu0 %v151
    %211 = vmatprep.subr.mxu0 0.0
    %212 = vmatpush1.msra.mxu0 %v152
    %213 = vmatprep.subr.mxu0 0.0
    %214 = vmatpush1.msra.mxu0 %v153
    %215 = vmatprep.subr.mxu0 0.0
    %216 = vmatpush1.msra.mxu0 %v154
    %217 = vmatprep.subr.mxu0 0.0
    %218 = vmatpush1.msra.mxu0 %v155
    %219 = vmatprep.subr.mxu0 0.0
    %220 = vmatpush1.msra.mxu0 %v156
    %221 = vmatprep.subr.mxu0 0.0
    %222 = vmatpush1.msra.mxu0 %v157
    %223 = vmatprep.subr.mxu0 0.0
    %224 = vmatpush1.msra.mxu0 %v158
    %225 = vmatprep.subr.mxu0 0.0
    %226 = vmatpush1.msra.mxu0 %v159
    %227 = vmatprep.subr.mxu0 0.0
    %228 = vmatpush1.msra.mxu0 %v160
    %229 = vmatprep.subr.mxu0 0.0
    %230 = vmatpush1.msra.mxu0 %v161
    %231 = vmatprep.subr.mxu0 0.0
    %232 = vmatpush1.msra.mxu0 %v162
    %233 = vmatprep.subr.mxu0 0.0
    %234 = vmatpush1.msra.mxu0 %v163
    %235 = vmatprep.mubr.f32.mxu0 %v129
    %236 = vmatmul.mubr.f32.gmra.mrb[0].mxu0 %v128
    %v237 = vpop.f32.mrb[0].mxu0
    %v238 = vadd.f32 %v169, %v237
    %v239 = vpop.f32.mrb[0].mxu0
    %240 = vmatprep.mubr.f32.mxu0 %v131
    %241 = vmatmul.mubr.f32.gmra.mrb[0].mxu0 %v130
    %v242 = vpop.f32.mrb[0].mxu0
    %v243 = vadd.f32 %v169, %v242
    %v244 = vpop.f32.mrb[0].mxu0
    %245 = vdwg.mxu0
    %v246 = vmax.f32 %v238, 0.0
    %v247 = vmax.f32 %v243, 0.0
    %248 = vst [vmem:[#allocation2] sm:$0xff] %v246
    %249 = vst [vmem:[#allocation2 + $0x8] sm:$0xff] %v247
    %v250 = vld [vmem:[#allocation3] sm:$0x1]
    %v251 = vld [vmem:[#allocation2] sm:$0xff]
    %v252 = vld [vmem:[#allocation2 + $0x8] sm:$0xff]
    %v254 = vsel %vm125, %v250, 0
    %256 = vmatprep.subr.mxu0 0.0
    %257 = vmatpush1.msra.mxu0 %v251
    %258 = vmatprep.subr.mxu0 0.0
    %259 = vmatpush1.msra.mxu0 %v252
    %260 = vmatprep.subr.mxu0 0.0
    %261 = vmatpush1.msra.mxu0 0.0
    %262 = vmatprep.subr.mxu0 0.0
    %263 = vmatpush1.msra.mxu0 0.0
    %264 = vmatprep.subr.mxu0 0.0
    %265 = vmatpush1.msra.mxu0 0.0
    %266 = vmatprep.subr.mxu0 0.0
    %267 = vmatpush1.msra.mxu0 0.0
    %268 = vmatprep.subr.mxu0 0.0
    %269 = vmatpush1.msra.mxu0 0.0
    %270 = vmatprep.subr.mxu0 0.0
    %271 = vmatpush1.msra.mxu0 0.0
    %272 = vmatprep.subr.mxu0 0.0
    %273 = vmatpush1.msra.mxu0 0.0
    %274 = vmatprep.subr.mxu0 0.0
    %275 = vmatpush1.msra.mxu0 0.0
    %276 = vmatprep.subr.mxu0 0.0
    %277 = vmatpush1.msra.mxu0 0.0
    %278 = vmatprep.subr.mxu0 0.0
    %279 = vmatpush1.msra.mxu0 0.0
    %280 = vmatprep.subr.mxu0 0.0
    %281 = vmatpush1.msra.mxu0 0.0
    %282 = vmatprep.subr.mxu0 0.0
    %283 = vmatpush1.msra.mxu0 0.0
    %284 = vmatprep.subr.mxu0 0.0
    %285 = vmatpush1.msra.mxu0 0.0
    %286 = vmatprep.subr.mxu0 0.0
    %287 = vmatpush1.msra.mxu0 0.0
    %288 = vmatprep.subr.mxu0 0.0
    %289 = vmatpush1.msra.mxu0 0.0
    %290 = vmatprep.subr.mxu0 0.0
    %291 = vmatpush1.msra.mxu0 0.0
    %292 = vmatprep.subr.mxu0 0.0
    %293 = vmatpush1.msra.mxu0 0.0
    %294 = vmatprep.subr.mxu0 0.0
    %295 = vmatpush1.msra.mxu0 0.0
    %296 = vmatprep.subr.mxu0 0.0
    %297 = vmatpush1.msra.mxu0 0.0
    %298 = vmatprep.subr.mxu0 0.0
    %299 = vmatpush1.msra.mxu0 0.0
    %300 = vmatprep.subr.mxu0 0.0
    %301 = vmatpush1.msra.mxu0 0.0
    %302 = vmatprep.subr.mxu0 0.0
    %303 = vmatpush1.msra.mxu0 0.0
    %304 = vmatprep.subr.mxu0 0.0
    %305 = vmatpush1.msra.mxu0 0.0
    %306 = vmatprep.subr.mxu0 0.0
    %307 = vmatpush1.msra.mxu0 0.0
    %308 = vmatprep.subr.mxu0 0.0
    %309 = vmatpush1.msra.mxu0 0.0
    %310 = vmatprep.subr.mxu0 0.0
    %311 = vmatpush1.msra.mxu0 0.0
    %312 = vmatprep.subr.mxu0 0.0
    %313 = vmatpush1.msra.mxu0 0.0
    %314 = vmatprep.subr.mxu0 0.0
    %315 = vmatpush1.msra.mxu0 0.0
    %316 = vmatprep.subr.mxu0 0.0
    %317 = vmatpush1.msra.mxu0 0.0
    %318 = vmatprep.subr.mxu0 0.0
    %319 = vmatpush1.msra.mxu0 0.0
    %320 = vmatprep.mubr.f32.mxu0 0.0
    %321 = vmatmul.mubr.f32.gmra.mrb[0].mxu0 %v254
    %v322 = vpop.f32.mrb[0].mxu0
    %v323 = vadd.f32 0.0, %v322
    %v324 = vpop.f32.mrb[0].mxu0
    %325 = vdwg.mxu0
    %v326 = vld [vmem:[#allocation2] sm:$0x1]
    %v327 = vadd.f32 %v326, %v323
    %v328 = vmax.f32 %v327, 0.0
    %329 = vst [vmem:[#allocation2] sm:$0x1] %v328
    %v330 = vld [vmem:[#allocation3 + $0x1] sm:$0x1]
    %v331 = vld [vmem:[#allocation2] sm:$0xff]
    %v332 = vld [vmem:[#allocation2 + $0x8] sm:$0xff]
    %v334 = vsel %vm125, %v330, 0
    %336 = vmatprep.subr.mxu0 0.0
    %337 = vmatpush1.msra.mxu0 %v331
    %338 = vmatprep.subr.mxu0 0.0
    %339 = vmatpush1.msra.mxu0 %v332
    %340 = vmatprep.subr.mxu0 0.0
    %341 = vmatpush1.msra.mxu0 0.0
    %342 = vmatprep.subr.mxu0 0.0
    %343 = vmatpush1.msra.mxu0 0.0
    %344 = vmatprep.subr.mxu0 0.0
    %345 = vmatpush1.msra.mxu0 0.0
    %346 = vmatprep.subr.mxu0 0.0
    %347 = vmatpush1.msra.mxu0 0.0
    %348 = vmatprep.subr.mxu0 0.0
    %349 = vmatpush1.msra.mxu0 0.0
    %350 = vmatprep.subr.mxu0 0.0
    %351 = vmatpush1.msra.mxu0 0.0
    %352 = vmatprep.subr.mxu0 0.0
    %353 = vmatpush1.msra.mxu0 0.0
    %354 = vmatprep.subr.mxu0 0.0
    %355 = vmatpush1.msra.mxu0 0.0
    %356 = vmatprep.subr.mxu0 0.0
    %357 = vmatpush1.msra.mxu0 0.0
    %358 = vmatprep.subr.mxu0 0.0
    %359 = vmatpush1.msra.mxu0 0.0
    %360 = vmatprep.subr.mxu0 0.0
    %361 = vmatpush1.msra.mxu0 0.0
    %362 = vmatprep.subr.mxu0 0.0
    %363 = vmatpush1.msra.mxu0 0.0
    %364 = vmatprep.subr.mxu0 0.0
    %365 = vmatpush1.msra.mxu0 0.0
    %366 = vmatprep.subr.mxu0 0.0
    %367 = vmatpush1.msra.mxu0 0.0
    %368 = vmatprep.subr.mxu0 0.0
    %369 = vmatpush1.msra.mxu0 0.0
    %370 = vmatprep.subr.mxu0 0.0
    %371 = vmatpush1.msra.mxu0 0.0
    %372 = vmatprep.subr.mxu0 0.0
    %373 = vmatpush1.msra.mxu0 0.0
    %374 = vmatprep.subr.mxu0 0.0
    %375 = vmatpush1.msra.mxu0 0.0
    %376 = vmatprep.subr.mxu0 0.0
    %377 = vmatpush1.msra.mxu0 0.0
    %378 = vmatprep.subr.mxu0 0.0
    %379 = vmatpush1.msra.mxu0 0.0
    %380 = vmatprep.subr.mxu0 0.0
    %381 = vmatpush1.msra.mxu0 0.0
    %382 = vmatprep.subr.mxu0 0.0
    %383 = vmatpush1.msra.mxu0 0.0
    %384 = vmatprep.subr.mxu0 0.0
    %385 = vmatpush1.msra.mxu0 0.0
    %386 = vmatprep.subr.mxu0 0.0
    %387 = vmatpush1.msra.mxu0 0.0
    %388 = vmatprep.subr.mxu0 0.0
    %389 = vmatpush1.msra.mxu0 0.0
    %390 = vmatprep.subr.mxu0 0.0
    %391 = vmatpush1.msra.mxu0 0.0
    %392 = vmatprep.subr.mxu0 0.0
    %393 = vmatpush1.msra.mxu0 0.0
    %394 = vmatprep.subr.mxu0 0.0
    %395 = vmatpush1.msra.mxu0 0.0
    %396 = vmatprep.subr.mxu0 0.0
    %397 = vmatpush1.msra.mxu0 0.0
    %398 = vmatprep.subr.mxu0 0.0
    %399 = vmatpush1.msra.mxu0 0.0
    %400 = vmatprep.mubr.f32.mxu0 0.0
    %401 = vmatmul.mubr.f32.gmra.mrb[0].mxu0 %v334
    %v402 = vpop.f32.mrb[0].mxu0
    %v403 = vadd.f32 0.0, %v402
    %v404 = vpop.f32.mrb[0].mxu0
    %405 = vdwg.mxu0
    %v406 = vld [vmem:[#allocation2 + $0x1] sm:$0x1]
    %v407 = vadd.f32 %v406, %v403
    %v408 = vmax.f32 %v407, 0.0
    %409 = vst [vmem:[#allocation2 + $0x1] sm:$0x1] %v408
    %v410 = vld [vmem:[#allocation3 + $0x2] sm:$0x1]
    %v411 = vld [vmem:[#allocation2] sm:$0xff]
    %v412 = vld [vmem:[#allocation2 + $0x8] sm:$0xff]
    %v414 = vsel %vm125, %v410, 0
    %416 = vmatprep.subr.mxu0 0.0
    %417 = vmatpush1.msra.mxu0 %v411
    %418 = vmatprep.subr.mxu0 0.0
    %419 = vmatpush1.msra.mxu0 %v412
    %420 = vmatprep.subr.mxu0 0.0
    %421 = vmatpush1.msra.mxu0 0.0
    %422 = vmatprep.subr.mxu0 0.0
    %423 = vmatpush1.msra.mxu0 0.0
    %424 = vmatprep.subr.mxu0 0.0
    %425 = vmatpush1.msra.mxu0 0.0
    %426 = vmatprep.subr.mxu0 0.0
    %427 = vmatpush1.msra.mxu0 0.0
    %428 = vmatprep.subr.mxu0 0.0
    %429 = vmatpush1.msra.mxu0 0.0
    %430 = vmatprep.subr.mxu0 0.0
    %431 = vmatpush1.msra.mxu0 0.0
    %432 = vmatprep.subr.mxu0 0.0
    %433 = vmatpush1.msra.mxu0 0.0
    %434 = vmatprep.subr.mxu0 0.0
    %435 = vmatpush1.msra.mxu0 0.0
    %436 = vmatprep.subr.mxu0 0.0
    %437 = vmatpush1.msra.mxu0 0.0
    %438 = vmatprep.subr.mxu0 0.0
    %439 = vmatpush1.msra.mxu0 0.0
    %440 = vmatprep.subr.mxu0 0.0
    %441 = vmatpush1.msra.mxu0 0.0
    %442 = vmatprep.subr.mxu0 0.0
    %443 = vmatpush1.msra.mxu0 0.0
    %444 = vmatprep.subr.mxu0 0.0
    %445 = vmatpush1.msra.mxu0 0.0
    %446 = vmatprep.subr.mxu0 0.0
    %447 = vmatpush1.msra.mxu0 0.0
    %448 = vmatprep.subr.mxu0 0.0
    %449 = vmatpush1.msra.mxu0 0.0
    %450 = vmatprep.subr.mxu0 0.0
    %451 = vmatpush1.msra.mxu0 0.0
    %452 = vmatprep.subr.mxu0 0.0
    %453 = vmatpush1.msra.mxu0 0.0
    %454 = vmatprep.subr.mxu0 0.0
    %455 = vmatpush1.msra.mxu0 0.0
    %456 = vmatprep.subr.mxu0 0.0
    %457 = vmatpush1.msra.mxu0 0.0
    %458 = vmatprep.subr.mxu0 0.0
    %459 = vmatpush1.msra.mxu0 0.0
    %460 = vmatprep.subr.mxu0 0.0
    %461 = vmatpush1.msra.mxu0 0.0
    %462 = vmatprep.subr.mxu0 0.0
    %463 = vmatpush1.msra.mxu0 0.0
    %464 = vmatprep.subr.mxu0 0.0
    %465 = vmatpush1.msra.mxu0 0.0
    %466 = vmatprep.subr.mxu0 0.0
    %467 = vmatpush1.msra.mxu0 0.0
    %468 = vmatprep.subr.mxu0 0.0
    %469 = vmatpush1.msra.mxu0 0.0
    %470 = vmatprep.subr.mxu0 0.0
    %471 = vmatpush1.msra.mxu0 0.0
    %472 = vmatprep.subr.mxu0 0.0
    %473 = vmatpush1.msra.mxu0 0.0
    %474 = vmatprep.subr.mxu0 0.0
    %475 = vmatpush1.msra.mxu0 0.0
    %476 = vmatprep.subr.mxu0 0.0
    %477 = vmatpush1.msra.mxu0 0.0
    %478 = vmatprep.subr.mxu0 0.0
    %479 = vmatpush1.msra.mxu0 0.0
    %480 = vmatprep.mubr.f32.mxu0 0.0
    %481 = vmatmul.mubr.f32.gmra.mrb[0].mxu0 %v414
    %v482 = vpop.f32.mrb[0].mxu0
    %v483 = vadd.f32 0.0, %v482
    %v484 = vpop.f32.mrb[0].mxu0
    %485 = vdwg.mxu0
    %v486 = vld [vmem:[#allocation2 + $0x2] sm:$0x1]
    %v487 = vadd.f32 %v486, %v483
    %v488 = vmax.f32 %v487, 0.0
    %489 = vst [vmem:[#allocation2 + $0x2] sm:$0x1] %v488
    %v490 = vld [vmem:[#allocation3 + $0x3] sm:$0x1]
    %v491 = vld [vmem:[#allocation2] sm:$0xff]
    %v492 = vld [vmem:[#allocation2 + $0x8] sm:$0xff]
    %v494 = vsel %vm125, %v490, 0
    %496 = vmatprep.subr.mxu0 0.0
    %497 = vmatpush1.msra.mxu0 %v491
    %498 = vmatprep.subr.mxu0 0.0
    %499 = vmatpush1.msra.mxu0 %v492
    %500 = vmatprep.subr.mxu0 0.0
    %501 = vmatpush1.msra.mxu0 0.0
    %502 = vmatprep.subr.mxu0 0.0
    %503 = vmatpush1.msra.mxu0 0.0
    %504 = vmatprep.subr.mxu0 0.0
    %505 = vmatpush1.msra.mxu0 0.0
    %506 = vmatprep.subr.mxu0 0.0
    %507 = vmatpush1.msra.mxu0 0.0
    %508 = vmatprep.subr.mxu0 0.0
    %509 = vmatpush1.msra.mxu0 0.0
    %510 = vmatprep.subr.mxu0 0.0
    %511 = vmatpush1.msra.mxu0 0.0
    %512 = vmatprep.subr.mxu0 0.0
    %513 = vmatpush1.msra.mxu0 0.0
    %514 = vmatprep.subr.mxu0 0.0
    %515 = vmatpush1.msra.mxu0 0.0
    %516 = vmatprep.subr.mxu0 0.0
    %517 = vmatpush1.msra.mxu0 0.0
    %518 = vmatprep.subr.mxu0 0.0
    %519 = vmatpush1.msra.mxu0 0.0
    %520 = vmatprep.subr.mxu0 0.0
    %521 = vmatpush1.msra.mxu0 0.0
    %522 = vmatprep.subr.mxu0 0.0
    %523 = vmatpush1.msra.mxu0 0.0
    %524 = vmatprep.subr.mxu0 0.0
    %525 = vmatpush1.msra.mxu0 0.0
    %526 = vmatprep.subr.mxu0 0.0
    %527 = vmatpush1.msra.mxu0 0.0
    %528 = vmatprep.subr.mxu0 0.0
    %529 = vmatpush1.msra.mxu0 0.0
    %530 = vmatprep.subr.mxu0 0.0
    %531 = vmatpush1.msra.mxu0 0.0
    %532 = vmatprep.subr.mxu0 0.0
    %533 = vmatpush1.msra.mxu0 0.0
    %534 = vmatprep.subr.mxu0 0.0
    %535 = vmatpush1.msra.mxu0 0.0
    %536 = vmatprep.subr.mxu0 0.0
    %537 = vmatpush1.msra.mxu0 0.0
    %538 = vmatprep.subr.mxu0 0.0
    %539 = vmatpush1.msra.mxu0 0.0
    %540 = vmatprep.subr.mxu0 0.0
    %541 = vmatpush1.msra.mxu0 0.0
    %542 = vmatprep.subr.mxu0 0.0
    %543 = vmatpush1.msra.mxu0 0.0
    %544 = vmatprep.subr.mxu0 0.0
    %545 = vmatpush1.msra.mxu0 0.0
    %546 = vmatprep.subr.mxu0 0.0
    %547 = vmatpush1.msra.mxu0 0.0
    %548 = vmatprep.subr.mxu0 0.0
    %549 = vmatpush1.msra.mxu0 0.0
    %550 = vmatprep.subr.mxu0 0.0
    %551 = vmatpush1.msra.mxu0 0.0
    %552 = vmatprep.subr.mxu0 0.0
    %553 = vmatpush1.msra.mxu0 0.0
    %554 = vmatprep.subr.mxu0 0.0
    %555 = vmatpush1.msra.mxu0 0.0
    %556 = vmatprep.subr.mxu0 0.0
    %557 = vmatpush1.msra.mxu0 0.0
    %558 = vmatprep.subr.mxu0 0.0
    %559 = vmatpush1.msra.mxu0 0.0
    %560 = vmatprep.mubr.f32.mxu0 0.0
    %561 = vmatmul.mubr.f32.gmra.mrb[0].mxu0 %v494
    %v562 = vpop.f32.mrb[0].mxu0
    %v563 = vadd.f32 0.0, %v562
    %v564 = vpop.f32.mrb[0].mxu0
    %565 = vdwg.mxu0
    %v566 = vld [vmem:[#allocation2 + $0x3] sm:$0x1]
    %v567 = vadd.f32 %v566, %v563
    %v568 = vmax.f32 %v567, 0.0
    %569 = vst [vmem:[#allocation2 + $0x3] sm:$0x1] %v568
    %v570 = vld [vmem:[#allocation3 + $0x4] sm:$0x1]
    %v571 = vld [vmem:[#allocation2] sm:$0xff]
    %v572 = vld [vmem:[#allocation2 + $0x8] sm:$0xff]
    %v574 = vsel %vm125, %v570, 0
    %576 = vmatprep.subr.mxu0 0.0
    %577 = vmatpush1.msra.mxu0 %v571
    %578 = vmatprep.subr.mxu0 0.0
    %579 = vmatpush1.msra.mxu0 %v572
    %580 = vmatprep.subr.mxu0 0.0
    %581 = vmatpush1.msra.mxu0 0.0
    %582 = vmatprep.subr.mxu0 0.0
    %583 = vmatpush1.msra.mxu0 0.0
    %584 = vmatprep.subr.mxu0 0.0
    %585 = vmatpush1.msra.mxu0 0.0
    %586 = vmatprep.subr.mxu0 0.0
    %587 = vmatpush1.msra.mxu0 0.0
    %588 = vmatprep.subr.mxu0 0.0
    %589 = vmatpush1.msra.mxu0 0.0
    %590 = vmatprep.subr.mxu0 0.0
    %591 = vmatpush1.msra.mxu0 0.0
    %592 = vmatprep.subr.mxu0 0.0
    %593 = vmatpush1.msra.mxu0 0.0
    %594 = vmatprep.subr.mxu0 0.0
    %595 = vmatpush1.msra.mxu0 0.0
    %596 = vmatprep.subr.mxu0 0.0
    %597 = vmatpush1.msra.mxu0 0.0
    %598 = vmatprep.subr.mxu0 0.0
    %599 = vmatpush1.msra.mxu0 0.0
    %600 = vmatprep.subr.mxu0 0.0
    %601 = vmatpush1.msra.mxu0 0.0
    %602 = vmatprep.subr.mxu0 0.0
    %603 = vmatpush1.msra.mxu0 0.0
    %604 = vmatprep.subr.mxu0 0.0
    %605 = vmatpush1.msra.mxu0 0.0
    %606 = vmatprep.subr.mxu0 0.0
    %607 = vmatpush1.msra.mxu0 0.0
    %608 = vmatprep.subr.mxu0 0.0
    %609 = vmatpush1.msra.mxu0 0.0
    %610 = vmatprep.subr.mxu0 0.0
    %611 = vmatpush1.msra.mxu0 0.0
    %612 = vmatprep.subr.mxu0 0.0
    %613 = vmatpush1.msra.mxu0 0.0
    %614 = vmatprep.subr.mxu0 0.0
    %615 = vmatpush1.msra.mxu0 0.0
    %616 = vmatprep.subr.mxu0 0.0
    %617 = vmatpush1.msra.mxu0 0.0
    %618 = vmatprep.subr.mxu0 0.0
    %619 = vmatpush1.msra.mxu0 0.0
    %620 = vmatprep.subr.mxu0 0.0
    %621 = vmatpush1.msra.mxu0 0.0
    %622 = vmatprep.subr.mxu0 0.0
    %623 = vmatpush1.msra.mxu0 0.0
    %624 = vmatprep.subr.mxu0 0.0
    %625 = vmatpush1.msra.mxu0 0.0
    %626 = vmatprep.subr.mxu0 0.0
    %627 = vmatpush1.msra.mxu0 0.0
    %628 = vmatprep.subr.mxu0 0.0
    %629 = vmatpush1.msra.mxu0 0.0
    %630 = vmatprep.subr.mxu0 0.0
    %631 = vmatpush1.msra.mxu0 0.0
    %632 = vmatprep.subr.mxu0 0.0
    %633 = vmatpush1.msra.mxu0 0.0
    %634 = vmatprep.subr.mxu0 0.0
    %635 = vmatpush1.msra.mxu0 0.0
    %636 = vmatprep.subr.mxu0 0.0
    %637 = vmatpush1.msra.mxu0 0.0
    %638 = vmatprep.subr.mxu0 0.0
    %639 = vmatpush1.msra.mxu0 0.0
    %640 = vmatprep.mubr.f32.mxu0 0.0
    %641 = vmatmul.mubr.f32.gmra.mrb[0].mxu0 %v574
    %v642 = vpop.f32.mrb[0].mxu0
    %v643 = vadd.f32 0.0, %v642
    %v644 = vpop.f32.mrb[0].mxu0
    %645 = vdwg.mxu0
    %v646 = vld [vmem:[#allocation2 + $0x4] sm:$0x1]
    %v647 = vadd.f32 %v646, %v643
    %v648 = vmax.f32 %v647, 0.0
    %649 = vst [vmem:[#allocation2 + $0x4] sm:$0x1] %v648
    %v650 = vld [vmem:[#allocation3 + $0x5] sm:$0x1]
    %v651 = vld [vmem:[#allocation2] sm:$0xff]
    %v652 = vld [vmem:[#allocation2 + $0x8] sm:$0xff]
    %v654 = vsel %vm125, %v650, 0
    %656 = vmatprep.subr.mxu0 0.0
    %657 = vmatpush1.msra.mxu0 %v651
    %658 = vmatprep.subr.mxu0 0.0
    %659 = vmatpush1.msra.mxu0 %v652
    %660 = vmatprep.subr.mxu0 0.0
    %661 = vmatpush1.msra.mxu0 0.0
    %662 = vmatprep.subr.mxu0 0.0
    %663 = vmatpush1.msra.mxu0 0.0
    %664 = vmatprep.subr.mxu0 0.0
    %665 = vmatpush1.msra.mxu0 0.0
    %666 = vmatprep.subr.mxu0 0.0
    %667 = vmatpush1.msra.mxu0 0.0
    %668 = vmatprep.subr.mxu0 0.0
    %669 = vmatpush1.msra.mxu0 0.0
    %670 = vmatprep.subr.mxu0 0.0
    %671 = vmatpush1.msra.mxu0 0.0
    %672 = vmatprep.subr.mxu0 0.0
    %673 = vmatpush1.msra.mxu0 0.0
    %674 = vmatprep.subr.mxu0 0.0
    %675 = vmatpush1.msra.mxu0 0.0
    %676 = vmatprep.subr.mxu0 0.0
    %677 = vmatpush1.msra.mxu0 0.0
    %678 = vmatprep.subr.mxu0 0.0
    %679 = vmatpush1.msra.mxu0 0.0
    %680 = vmatprep.subr.mxu0 0.0
    %681 = vmatpush1.msra.mxu0 0.0
    %682 = vmatprep.subr.mxu0 0.0
    %683 = vmatpush1.msra.mxu0 0.0
    %684 = vmatprep.subr.mxu0 0.0
    %685 = vmatpush1.msra.mxu0 0.0
    %686 = vmatprep.subr.mxu0 0.0
    %687 = vmatpush1.msra.mxu0 0.0
    %688 = vmatprep.subr.mxu0 0.0
    %689 = vmatpush1.msra.mxu0 0.0
    %690 = vmatprep.subr.mxu0 0.0
    %691 = vmatpush1.msra.mxu0 0.0
    %692 = vmatprep.subr.mxu0 0.0
    %693 = vmatpush1.msra.mxu0 0.0
    %694 = vmatprep.subr.mxu0 0.0
    %695 = vmatpush1.msra.mxu0 0.0
    %696 = vmatprep.subr.mxu0 0.0
    %697 = vmatpush1.msra.mxu0 0.0
    %698 = vmatprep.subr.mxu0 0.0
    %699 = vmatpush1.msra.mxu0 0.0
    %700 = vmatprep.subr.mxu0 0.0
    %701 = vmatpush1.msra.mxu0 0.0
    %702 = vmatprep.subr.mxu0 0.0
    %703 = vmatpush1.msra.mxu0 0.0
    %704 = vmatprep.subr.mxu0 0.0
    %705 = vmatpush1.msra.mxu0 0.0
    %706 = vmatprep.subr.mxu0 0.0
    %707 = vmatpush1.msra.mxu0 0.0
    %708 = vmatprep.subr.mxu0 0.0
    %709 = vmatpush1.msra.mxu0 0.0
    %710 = vmatprep.subr.mxu0 0.0
    %711 = vmatpush1.msra.mxu0 0.0
    %712 = vmatprep.subr.mxu0 0.0
    %713 = vmatpush1.msra.mxu0 0.0
    %714 = vmatprep.subr.mxu0 0.0
    %715 = vmatpush1.msra.mxu0 0.0
    %716 = vmatprep.subr.mxu0 0.0
    %717 = vmatpush1.msra.mxu0 0.0
    %718 = vmatprep.subr.mxu0 0.0
    %719 = vmatpush1.msra.mxu0 0.0
    %720 = vmatprep.mubr.f32.mxu0 0.0
    %721 = vmatmul.mubr.f32.gmra.mrb[0].mxu0 %v654
    %v722 = vpop.f32.mrb[0].mxu0
    %v723 = vadd.f32 0.0, %v722
    %v724 = vpop.f32.mrb[0].mxu0
    %725 = vdwg.mxu0
    %v726 = vld [vmem:[#allocation2 + $0x5] sm:$0x1]
    %v727 = vadd.f32 %v726, %v723
    %v728 = vmax.f32 %v727, 0.0
    %729 = vst [vmem:[#allocation2 + $0x5] sm:$0x1] %v728
    %v730 = vld [vmem:[#allocation3 + $0x6] sm:$0x1]
    %v731 = vld [vmem:[#allocation2] sm:$0xff]
    %v732 = vld [vmem:[#allocation2 + $0x8] sm:$0xff]
    %v734 = vsel %vm125, %v730, 0
    %736 = vmatprep.subr.mxu0 0.0
    %737 = vmatpush1.msra.mxu0 %v731
    %738 = vmatprep.subr.mxu0 0.0
    %739 = vmatpush1.msra.mxu0 %v732
    %740 = vmatprep.subr.mxu0 0.0
    %741 = vmatpush1.msra.mxu0 0.0
    %742 = vmatprep.subr.mxu0 0.0
    %743 = vmatpush1.msra.mxu0 0.0
    %744 = vmatprep.subr.mxu0 0.0
    %745 = vmatpush1.msra.mxu0 0.0
    %746 = vmatprep.subr.mxu0 0.0
    %747 = vmatpush1.msra.mxu0 0.0
    %748 = vmatprep.subr.mxu0 0.0
    %749 = vmatpush1.msra.mxu0 0.0
    %750 = vmatprep.subr.mxu0 0.0
    %751 = vmatpush1.msra.mxu0 0.0
    %752 = vmatprep.subr.mxu0 0.0
    %753 = vmatpush1.msra.mxu0 0.0
    %754 = vmatprep.subr.mxu0 0.0
    %755 = vmatpush1.msra.mxu0 0.0
    %756 = vmatprep.subr.mxu0 0.0
    %757 = vmatpush1.msra.mxu0 0.0
    %758 = vmatprep.subr.mxu0 0.0
    %759 = vmatpush1.msra.mxu0 0.0
    %760 = vmatprep.subr.mxu0 0.0
    %761 = vmatpush1.msra.mxu0 0.0
    %762 = vmatprep.subr.mxu0 0.0
    %763 = vmatpush1.msra.mxu0 0.0
    %764 = vmatprep.subr.mxu0 0.0
    %765 = vmatpush1.msra.mxu0 0.0
    %766 = vmatprep.subr.mxu0 0.0
    %767 = vmatpush1.msra.mxu0 0.0
    %768 = vmatprep.subr.mxu0 0.0
    %769 = vmatpush1.msra.mxu0 0.0
    %770 = vmatprep.subr.mxu0 0.0
    %771 = vmatpush1.msra.mxu0 0.0
    %772 = vmatprep.subr.mxu0 0.0
    %773 = vmatpush1.msra.mxu0 0.0
    %774 = vmatprep.subr.mxu0 0.0
    %775 = vmatpush1.msra.mxu0 0.0
    %776 = vmatprep.subr.mxu0 0.0
    %777 = vmatpush1.msra.mxu0 0.0
    %778 = vmatprep.subr.mxu0 0.0
    %779 = vmatpush1.msra.mxu0 0.0
    %780 = vmatprep.subr.mxu0 0.0
    %781 = vmatpush1.msra.mxu0 0.0
    %782 = vmatprep.subr.mxu0 0.0
    %783 = vmatpush1.msra.mxu0 0.0
    %784 = vmatprep.subr.mxu0 0.0
    %785 = vmatpush1.msra.mxu0 0.0
    %786 = vmatprep.subr.mxu0 0.0
    %787 = vmatpush1.msra.mxu0 0.0
    %788 = vmatprep.subr.mxu0 0.0
    %789 = vmatpush1.msra.mxu0 0.0
    %790 = vmatprep.subr.mxu0 0.0
    %791 = vmatpush1.msra.mxu0 0.0
    %792 = vmatprep.subr.mxu0 0.0
    %793 = vmatpush1.msra.mxu0 0.0
    %794 = vmatprep.subr.mxu0 0.0
    %795 = vmatpush1.msra.mxu0 0.0
    %796 = vmatprep.subr.mxu0 0.0
    %797 = vmatpush1.msra.mxu0 0.0
    %798 = vmatprep.subr.mxu0 0.0
    %799 = vmatpush1.msra.mxu0 0.0
    %800 = vmatprep.mubr.f32.mxu0 0.0
    %801 = vmatmul.mubr.f32.gmra.mrb[0].mxu0 %v734
    %v802 = vpop.f32.mrb[0].mxu0
    %v803 = vadd.f32 0.0, %v802
    %v804 = vpop.f32.mrb[0].mxu0
    %805 = vdwg.mxu0
    %v806 = vld [vmem:[#allocation2 + $0x6] sm:$0x1]
    %v807 = vadd.f32 %v806, %v803
    %v808 = vmax.f32 %v807, 0.0
    %809 = vst [vmem:[#allocation2 + $0x6] sm:$0x1] %v808
    %v810 = vld [vmem:[#allocation3 + $0x7] sm:$0x1]
    %v811 = vld [vmem:[#allocation2] sm:$0xff]
    %v812 = vld [vmem:[#allocation2 + $0x8] sm:$0xff]
    %v814 = vsel %vm125, %v810, 0
    %816 = vmatprep.subr.mxu0 0.0
    %817 = vmatpush1.msra.mxu0 %v811
    %818 = vmatprep.subr.mxu0 0.0
    %819 = vmatpush1.msra.mxu0 %v812
    %820 = vmatprep.subr.mxu0 0.0
    %821 = vmatpush1.msra.mxu0 0.0
    %822 = vmatprep.subr.mxu0 0.0
    %823 = vmatpush1.msra.mxu0 0.0
    %824 = vmatprep.subr.mxu0 0.0
    %825 = vmatpush1.msra.mxu0 0.0
    %826 = vmatprep.subr.mxu0 0.0
    %827 = vmatpush1.msra.mxu0 0.0
    %828 = vmatprep.subr.mxu0 0.0
    %829 = vmatpush1.msra.mxu0 0.0
    %830 = vmatprep.subr.mxu0 0.0
    %831 = vmatpush1.msra.mxu0 0.0
    %832 = vmatprep.subr.mxu0 0.0
    %833 = vmatpush1.msra.mxu0 0.0
    %834 = vmatprep.subr.mxu0 0.0
    %835 = vmatpush1.msra.mxu0 0.0
    %836 = vmatprep.subr.mxu0 0.0
    %837 = vmatpush1.msra.mxu0 0.0
    %838 = vmatprep.subr.mxu0 0.0
    %839 = vmatpush1.msra.mxu0 0.0
    %840 = vmatprep.subr.mxu0 0.0
    %841 = vmatpush1.msra.mxu0 0.0
    %842 = vmatprep.subr.mxu0 0.0
    %843 = vmatpush1.msra.mxu0 0.0
    %844 = vmatprep.subr.mxu0 0.0
    %845 = vmatpush1.msra.mxu0 0.0
    %846 = vmatprep.subr.mxu0 0.0
    %847 = vmatpush1.msra.mxu0 0.0
    %848 = vmatprep.subr.mxu0 0.0
    %849 = vmatpush1.msra.mxu0 0.0
    %850 = vmatprep.subr.mxu0 0.0
    %851 = vmatpush1.msra.mxu0 0.0
    %852 = vmatprep.subr.mxu0 0.0
    %853 = vmatpush1.msra.mxu0 0.0
    %854 = vmatprep.subr.mxu0 0.0
    %855 = vmatpush1.msra.mxu0 0.0
    %856 = vmatprep.subr.mxu0 0.0
    %857 = vmatpush1.msra.mxu0 0.0
    %858 = vmatprep.subr.mxu0 0.0
    %859 = vmatpush1.msra.mxu0 0.0
    %860 = vmatprep.subr.mxu0 0.0
    %861 = vmatpush1.msra.mxu0 0.0
    %862 = vmatprep.subr.mxu0 0.0
    %863 = vmatpush1.msra.mxu0 0.0
    %864 = vmatprep.subr.mxu0 0.0
    %865 = vmatpush1.msra.mxu0 0.0
    %866 = vmatprep.subr.mxu0 0.0
    %867 = vmatpush1.msra.mxu0 0.0
    %868 = vmatprep.subr.mxu0 0.0
    %869 = vmatpush1.msra.mxu0 0.0
    %870 = vmatprep.subr.mxu0 0.0
    %871 = vmatpush1.msra.mxu0 0.0
    %872 = vmatprep.subr.mxu0 0.0
    %873 = vmatpush1.msra.mxu0 0.0
    %874 = vmatprep.subr.mxu0 0.0
    %875 = vmatpush1.msra.mxu0 0.0
    %876 = vmatprep.subr.mxu0 0.0
    %877 = vmatpush1.msra.mxu0 0.0
    %878 = vmatprep.subr.mxu0 0.0
    %879 = vmatpush1.msra.mxu0 0.0
    %880 = vmatprep.mubr.f32.mxu0 0.0
    %881 = vmatmul.mubr.f32.gmra.mrb[0].mxu0 %v814
    %v882 = vpop.f32.mrb[0].mxu0
    %v883 = vadd.f32 0.0, %v882
    %v884 = vpop.f32.mrb[0].mxu0
    %885 = vdwg.mxu0
    %v886 = vld [vmem:[#allocation2 + $0x7] sm:$0x1]
    %v887 = vadd.f32 %v886, %v883
    %v888 = vmax.f32 %v887, 0.0
    %889 = vst [vmem:[#allocation2 + $0x7] sm:$0x1] %v888
    %v890 = vld [vmem:[#allocation3 + $0x8] sm:$0x1]
    %v891 = vld [vmem:[#allocation2] sm:$0xff]
    %v892 = vld [vmem:[#allocation2 + $0x8] sm:$0xff]
    %v894 = vsel %vm125, %v890, 0
    %896 = vmatprep.subr.mxu0 0.0
    %897 = vmatpush1.msra.mxu0 %v891
    %898 = vmatprep.subr.mxu0 0.0
    %899 = vmatpush1.msra.mxu0 %v892
    %900 = vmatprep.subr.mxu0 0.0
    %901 = vmatpush1.msra.mxu0 0.0
    %902 = vmatprep.subr.mxu0 0.0
    %903 = vmatpush1.msra.mxu0 0.0
    %904 = vmatprep.subr.mxu0 0.0
    %905 = vmatpush1.msra.mxu0 0.0
    %906 = vmatprep.subr.mxu0 0.0
    %907 = vmatpush1.msra.mxu0 0.0
    %908 = vmatprep.subr.mxu0 0.0
    %909 = vmatpush1.msra.mxu0 0.0
    %910 = vmatprep.subr.mxu0 0.0
    %911 = vmatpush1.msra.mxu0 0.0
    %912 = vmatprep.subr.mxu0 0.0
    %913 = vmatpush1.msra.mxu0 0.0
    %914 = vmatprep.subr.mxu0 0.0
    %915 = vmatpush1.msra.mxu0 0.0
    %916 = vmatprep.subr.mxu0 0.0
    %917 = vmatpush1.msra.mxu0 0.0
    %918 = vmatprep.subr.mxu0 0.0
    %919 = vmatpush1.msra.mxu0 0.0
    %920 = vmatprep.subr.mxu0 0.0
    %921 = vmatpush1.msra.mxu0 0.0
    %922 = vmatprep.subr.mxu0 0.0
    %923 = vmatpush1.msra.mxu0 0.0
    %924 = vmatprep.subr.mxu0 0.0
    %925 = vmatpush1.msra.mxu0 0.0
    %926 = vmatprep.subr.mxu0 0.0
    %927 = vmatpush1.msra.mxu0 0.0
    %928 = vmatprep.subr.mxu0 0.0
    %929 = vmatpush1.msra.mxu0 0.0
    %930 = vmatprep.subr.mxu0 0.0
    %931 = vmatpush1.msra.mxu0 0.0
    %932 = vmatprep.subr.mxu0 0.0
    %933 = vmatpush1.msra.mxu0 0.0
    %934 = vmatprep.subr.mxu0 0.0
    %935 = vmatpush1.msra.mxu0 0.0
    %936 = vmatprep.subr.mxu0 0.0
    %937 = vmatpush1.msra.mxu0 0.0
    %938 = vmatprep.subr.mxu0 0.0
    %939 = vmatpush1.msra.mxu0 0.0
    %940 = vmatprep.subr.mxu0 0.0
    %941 = vmatpush1.msra.mxu0 0.0
    %942 = vmatprep.subr.mxu0 0.0
    %943 = vmatpush1.msra.mxu0 0.0
    %944 = vmatprep.subr.mxu0 0.0
    %945 = vmatpush1.msra.mxu0 0.0
    %946 = vmatprep.subr.mxu0 0.0
    %947 = vmatpush1.msra.mxu0 0.0
    %948 = vmatprep.subr.mxu0 0.0
    %949 = vmatpush1.msra.mxu0 0.0
    %950 = vmatprep.subr.mxu0 0.0
    %951 = vmatpush1.msra.mxu0 0.0
    %952 = vmatprep.subr.mxu0 0.0
    %953 = vmatpush1.msra.mxu0 0.0
    %954 = vmatprep.subr.mxu0 0.0
    %955 = vmatpush1.msra.mxu0 0.0
    %956 = vmatprep.subr.mxu0 0.0
    %957 = vmatpush1.msra.mxu0 0.0
    %958 = vmatprep.subr.mxu0 0.0
    %959 = vmatpush1.msra.mxu0 0.0
    %960 = vmatprep.mubr.f32.mxu0 0.0
    %961 = vmatmul.mubr.f32.gmra.mrb[0].mxu0 %v894
    %v962 = vpop.f32.mrb[0].mxu0
    %v963 = vadd.f32 0.0, %v962
    %v964 = vpop.f32.mrb[0].mxu0
    %965 = vdwg.mxu0
    %v966 = vld [vmem:[#allocation2 + $0x8] sm:$0x1]
    %v967 = vadd.f32 %v966, %v963
    %v968 = vmax.f32 %v967, 0.0
    %969 = vst [vmem:[#allocation2 + $0x8] sm:$0x1] %v968
    %v970 = vld [vmem:[#allocation3 + $0x9] sm:$0x1]
    %v971 = vld [vmem:[#allocation2] sm:$0xff]
    %v972 = vld [vmem:[#allocation2 + $0x8] sm:$0xff]
    %v974 = vsel %vm125, %v970, 0
    %976 = vmatprep.subr.mxu0 0.0
    %977 = vmatpush1.msra.mxu0 %v971
    %978 = vmatprep.subr.mxu0 0.0
    %979 = vmatpush1.msra.mxu0 %v972
    %980 = vmatprep.subr.mxu0 0.0
    %981 = vmatpush1.msra.mxu0 0.0
    %982 = vmatprep.subr.mxu0 0.0
    %983 = vmatpush1.msra.mxu0 0.0
    %984 = vmatprep.subr.mxu0 0.0
    %985 = vmatpush1.msra.mxu0 0.0
    %986 = vmatprep.subr.mxu0 0.0
    %987 = vmatpush1.msra.mxu0 0.0
    %988 = vmatprep.subr.mxu0 0.0
    %989 = vmatpush1.msra.mxu0 0.0
    %990 = vmatprep.subr.mxu0 0.0
    %991 = vmatpush1.msra.mxu0 0.0
    %992 = vmatprep.subr.mxu0 0.0
    %993 = vmatpush1.msra.mxu0 0.0
    %994 = vmatprep.subr.mxu0 0.0
    %995 = vmatpush1.msra.mxu0 0.0
    %996 = vmatprep.subr.mxu0 0.0
    %997 = vmatpush1.msra.mxu0 0.0
    %998 = vmatprep.subr.mxu0 0.0
    %999 = vmatpush1.msra.mxu0 0.0
    %1000 = vmatprep.subr.mxu0 0.0
    %1001 = vmatpush1.msra.mxu0 0.0
    %1002 = vmatprep.subr.mxu0 0.0
    %1003 = vmatpush1.msra.mxu0 0.0
    %1004 = vmatprep.subr.mxu0 0.0
    %1005 = vmatpush1.msra.mxu0 0.0
    %1006 = vmatprep.subr.mxu0 0.0
    %1007 = vmatpush1.msra.mxu0 0.0
    %1008 = vmatprep.subr.mxu0 0.0
    %1009 = vmatpush1.msra.mxu0 0.0
    %1010 = vmatprep.subr.mxu0 0.0
    %1011 = vmatpush1.msra.mxu0 0.0
    %1012 = vmatprep.subr.mxu0 0.0
    %1013 = vmatpush1.msra.mxu0 0.0
    %1014 = vmatprep.subr.mxu0 0.0
    %1015 = vmatpush1.msra.mxu0 0.0
    %1016 = vmatprep.subr.mxu0 0.0
    %1017 = vmatpush1.msra.mxu0 0.0
    %1018 = vmatprep.subr.mxu0 0.0
    %1019 = vmatpush1.msra.mxu0 0.0
    %1020 = vmatprep.subr.mxu0 0.0
    %1021 = vmatpush1.msra.mxu0 0.0
    %1022 = vmatprep.subr.mxu0 0.0
    %1023 = vmatpush1.msra.mxu0 0.0
    %1024 = vmatprep.subr.mxu0 0.0
    %1025 = vmatpush1.msra.mxu0 0.0
    %1026 = vmatprep.subr.mxu0 0.0
    %1027 = vmatpush1.msra.mxu0 0.0
    %1028 = vmatprep.subr.mxu0 0.0
    %1029 = vmatpush1.msra.mxu0 0.0
    %1030 = vmatprep.subr.mxu0 0.0
    %1031 = vmatpush1.msra.mxu0 0.0
    %1032 = vmatprep.subr.mxu0 0.0
    %1033 = vmatpush1.msra.mxu0 0.0
    %1034 = vmatprep.subr.mxu0 0.0
    %1035 = vmatpush1.msra.mxu0 0.0
    %1036 = vmatprep.subr.mxu0 0.0
    %1037 = vmatpush1.msra.mxu0 0.0
    %1038 = vmatprep.subr.mxu0 0.0
    %1039 = vmatpush1.msra.mxu0 0.0
    %1040 = vmatprep.mubr.f32.mxu0 0.0
    %1041 = vmatmul.mubr.f32.gmra.mrb[0].mxu0 %v974
    %v1042 = vpop.f32.mrb[0].mxu0
    %v1043 = vadd.f32 0.0, %v1042
    %v1044 = vpop.f32.mrb[0].mxu0
    %1045 = vdwg.mxu0
    %v1046 = vld [vmem:[#allocation2 + $0x9] sm:$0x1]
    %v1047 = vadd.f32 %v1046, %v1043
    %v1048 = vmax.f32 %v1047, 0.0
    %1049 = vst [vmem:[#allocation2 + $0x9] sm:$0x1] %v1048
    %v1050 = vld [vmem:[#allocation3 + $0xa] sm:$0x1]
    %v1051 = vld [vmem:[#allocation2] sm:$0xff]
    %v1052 = vld [vmem:[#allocation2 + $0x8] sm:$0xff]
    %v1054 = vsel %vm125, %v1050, 0
    %1056 = vmatprep.subr.mxu0 0.0
    %1057 = vmatpush1.msra.mxu0 %v1051
    %1058 = vmatprep.subr.mxu0 0.0
    %1059 = vmatpush1.msra.mxu0 %v1052
    %1060 = vmatprep.subr.mxu0 0.0
    %1061 = vmatpush1.msra.mxu0 0.0
    %1062 = vmatprep.subr.mxu0 0.0
    %1063 = vmatpush1.msra.mxu0 0.0
    %1064 = vmatprep.subr.mxu0 0.0
    %1065 = vmatpush1.msra.mxu0 0.0
    %1066 = vmatprep.subr.mxu0 0.0
    %1067 = vmatpush1.msra.mxu0 0.0
    %1068 = vmatprep.subr.mxu0 0.0
    %1069 = vmatpush1.msra.mxu0 0.0
    %1070 = vmatprep.subr.mxu0 0.0
    %1071 = vmatpush1.msra.mxu0 0.0
    %1072 = vmatprep.subr.mxu0 0.0
    %1073 = vmatpush1.msra.mxu0 0.0
    %1074 = vmatprep.subr.mxu0 0.0
    %1075 = vmatpush1.msra.mxu0 0.0
    %1076 = vmatprep.subr.mxu0 0.0
    %1077 = vmatpush1.msra.mxu0 0.0
    %1078 = vmatprep.subr.mxu0 0.0
    %1079 = vmatpush1.msra.mxu0 0.0
    %1080 = vmatprep.subr.mxu0 0.0
    %1081 = vmatpush1.msra.mxu0 0.0
    %1082 = vmatprep.subr.mxu0 0.0
    %1083 = vmatpush1.msra.mxu0 0.0
    %1084 = vmatprep.subr.mxu0 0.0
    %1085 = vmatpush1.msra.mxu0 0.0
    %1086 = vmatprep.subr.mxu0 0.0
    %1087 = vmatpush1.msra.mxu0 0.0
    %1088 = vmatprep.subr.mxu0 0.0
    %1089 = vmatpush1.msra.mxu0 0.0
    %1090 = vmatprep.subr.mxu0 0.0
    %1091 = vmatpush1.msra.mxu0 0.0
    %1092 = vmatprep.subr.mxu0 0.0
    %1093 = vmatpush1.msra.mxu0 0.0
    %1094 = vmatprep.subr.mxu0 0.0
    %1095 = vmatpush1.msra.mxu0 0.0
    %1096 = vmatprep.subr.mxu0 0.0
    %1097 = vmatpush1.msra.mxu0 0.0
    %1098 = vmatprep.subr.mxu0 0.0
    %1099 = vmatpush1.msra.mxu0 0.0
    %1100 = vmatprep.subr.mxu0 0.0
    %1101 = vmatpush1.msra.mxu0 0.0
    %1102 = vmatprep.subr.mxu0 0.0
    %1103 = vmatpush1.msra.mxu0 0.0
    %1104 = vmatprep.subr.mxu0 0.0
    %1105 = vmatpush1.msra.mxu0 0.0
    %1106 = vmatprep.subr.mxu0 0.0
    %1107 = vmatpush1.msra.mxu0 0.0
    %1108 = vmatprep.subr.mxu0 0.0
    %1109 = vmatpush1.msra.mxu0 0.0
    %1110 = vmatprep.subr.mxu0 0.0
    %1111 = vmatpush1.msra.mxu0 0.0
    %1112 = vmatprep.subr.mxu0 0.0
    %1113 = vmatpush1.msra.mxu0 0.0
    %1114 = vmatprep.subr.mxu0 0.0
    %1115 = vmatpush1.msra.mxu0 0.0
    %1116 = vmatprep.subr.mxu0 0.0
    %1117 = vmatpush1.msra.mxu0 0.0
    %1118 = vmatprep.subr.mxu0 0.0
    %1119 = vmatpush1.msra.mxu0 0.0
    %1120 = vmatprep.mubr.f32.mxu0 0.0
    %1121 = vmatmul.mubr.f32.gmra.mrb[0].mxu0 %v1054
    %v1122 = vpop.f32.mrb[0].mxu0
    %v1123 = vadd.f32 0.0, %v1122
    %v1124 = vpop.f32.mrb[0].mxu0
    %1125 = vdwg.mxu0
    %v1126 = vld [vmem:[#allocation2 + $0xa] sm:$0x1]
    %v1127 = vadd.f32 %v1126, %v1123
    %v1128 = vmax.f32 %v1127, 0.0
    %1129 = vst [vmem:[#allocation2 + $0xa] sm:$0x1] %v1128
    %v1130 = vld [vmem:[#allocation3 + $0xb] sm:$0x1]
    %v1131 = vld [vmem:[#allocation2] sm:$0xff]
    %v1132 = vld [vmem:[#allocation2 + $0x8] sm:$0xff]
    %v1134 = vsel %vm125, %v1130, 0
    %1136 = vmatprep.subr.mxu0 0.0
    %1137 = vmatpush1.msra.mxu0 %v1131
    %1138 = vmatprep.subr.mxu0 0.0
    %1139 = vmatpush1.msra.mxu0 %v1132
    %1140 = vmatprep.subr.mxu0 0.0
    %1141 = vmatpush1.msra.mxu0 0.0
    %1142 = vmatprep.subr.mxu0 0.0
    %1143 = vmatpush1.msra.mxu0 0.0
    %1144 = vmatprep.subr.mxu0 0.0
    %1145 = vmatpush1.msra.mxu0 0.0
    %1146 = vmatprep.subr.mxu0 0.0
    %1147 = vmatpush1.msra.mxu0 0.0
    %1148 = vmatprep.subr.mxu0 0.0
    %1149 = vmatpush1.msra.mxu0 0.0
    %1150 = vmatprep.subr.mxu0 0.0
    %1151 = vmatpush1.msra.mxu0 0.0
    %1152 = vmatprep.subr.mxu0 0.0
    %1153 = vmatpush1.msra.mxu0 0.0
    %1154 = vmatprep.subr.mxu0 0.0
    %1155 = vmatpush1.msra.mxu0 0.0
    %1156 = vmatprep.subr.mxu0 0.0
    %1157 = vmatpush1.msra.mxu0 0.0
    %1158 = vmatprep.subr.mxu0 0.0
    %1159 = vmatpush1.msra.mxu0 0.0
    %1160 = vmatprep.subr.mxu0 0.0
    %1161 = vmatpush1.msra.mxu0 0.0
    %1162 = vmatprep.subr.mxu0 0.0
    %1163 = vmatpush1.msra.mxu0 0.0
    %1164 = vmatprep.subr.mxu0 0.0
    %1165 = vmatpush1.msra.mxu0 0.0
    %1166 = vmatprep.subr.mxu0 0.0
    %1167 = vmatpush1.msra.mxu0 0.0
    %1168 = vmatprep.subr.mxu0 0.0
    %1169 = vmatpush1.msra.mxu0 0.0
    %1170 = vmatprep.subr.mxu0 0.0
    %1171 = vmatpush1.msra.mxu0 0.0
    %1172 = vmatprep.subr.mxu0 0.0
    %1173 = vmatpush1.msra.mxu0 0.0
    %1174 = vmatprep.subr.mxu0 0.0
    %1175 = vmatpush1.msra.mxu0 0.0
    %1176 = vmatprep.subr.mxu0 0.0
    %1177 = vmatpush1.msra.mxu0 0.0
    %1178 = vmatprep.subr.mxu0 0.0
    %1179 = vmatpush1.msra.mxu0 0.0
    %1180 = vmatprep.subr.mxu0 0.0
    %1181 = vmatpush1.msra.mxu0 0.0
    %1182 = vmatprep.subr.mxu0 0.0
    %1183 = vmatpush1.msra.mxu0 0.0
    %1184 = vmatprep.subr.mxu0 0.0
    %1185 = vmatpush1.msra.mxu0 0.0
    %1186 = vmatprep.subr.mxu0 0.0
    %1187 = vmatpush1.msra.mxu0 0.0
    %1188 = vmatprep.subr.mxu0 0.0
    %1189 = vmatpush1.msra.mxu0 0.0
    %1190 = vmatprep.subr.mxu0 0.0
    %1191 = vmatpush1.msra.mxu0 0.0
    %1192 = vmatprep.subr.mxu0 0.0
    %1193 = vmatpush1.msra.mxu0 0.0
    %1194 = vmatprep.subr.mxu0 0.0
    %1195 = vmatpush1.msra.mxu0 0.0
    %1196 = vmatprep.subr.mxu0 0.0
    %1197 = vmatpush1.msra.mxu0 0.0
    %1198 = vmatprep.subr.mxu0 0.0
    %1199 = vmatpush1.msra.mxu0 0.0
    %1200 = vmatprep.mubr.f32.mxu0 0.0
    %1201 = vmatmul.mubr.f32.gmra.mrb[0].mxu0 %v1134
    %v1202 = vpop.f32.mrb[0].mxu0
    %v1203 = vadd.f32 0.0, %v1202
    %v1204 = vpop.f32.mrb[0].mxu0
    %1205 = vdwg.mxu0
    %v1206 = vld [vmem:[#allocation2 + $0xb] sm:$0x1]
    %v1207 = vadd.f32 %v1206, %v1203
    %v1208 = vmax.f32 %v1207, 0.0
    %1209 = vst [vmem:[#allocation2 + $0xb] sm:$0x1] %v1208
    %v1210 = vld [vmem:[#allocation3 + $0xc] sm:$0x1]
    %v1211 = vld [vmem:[#allocation2] sm:$0xff]
    %v1212 = vld [vmem:[#allocation2 + $0x8] sm:$0xff]
    %v1214 = vsel %vm125, %v1210, 0
    %1216 = vmatprep.subr.mxu0 0.0
    %1217 = vmatpush1.msra.mxu0 %v1211
    %1218 = vmatprep.subr.mxu0 0.0
    %1219 = vmatpush1.msra.mxu0 %v1212
    %1220 = vmatprep.subr.mxu0 0.0
    %1221 = vmatpush1.msra.mxu0 0.0
    %1222 = vmatprep.subr.mxu0 0.0
    %1223 = vmatpush1.msra.mxu0 0.0
    %1224 = vmatprep.subr.mxu0 0.0
    %1225 = vmatpush1.msra.mxu0 0.0
    %1226 = vmatprep.subr.mxu0 0.0
    %1227 = vmatpush1.msra.mxu0 0.0
    %1228 = vmatprep.subr.mxu0 0.0
    %1229 = vmatpush1.msra.mxu0 0.0
    %1230 = vmatprep.subr.mxu0 0.0
    %1231 = vmatpush1.msra.mxu0 0.0
    %1232 = vmatprep.subr.mxu0 0.0
    %1233 = vmatpush1.msra.mxu0 0.0
    %1234 = vmatprep.subr.mxu0 0.0
    %1235 = vmatpush1.msra.mxu0 0.0
    %1236 = vmatprep.subr.mxu0 0.0
    %1237 = vmatpush1.msra.mxu0 0.0
    %1238 = vmatprep.subr.mxu0 0.0
    %1239 = vmatpush1.msra.mxu0 0.0
    %1240 = vmatprep.subr.mxu0 0.0
    %1241 = vmatpush1.msra.mxu0 0.0
    %1242 = vmatprep.subr.mxu0 0.0
    %1243 = vmatpush1.msra.mxu0 0.0
    %1244 = vmatprep.subr.mxu0 0.0
    %1245 = vmatpush1.msra.mxu0 0.0
    %1246 = vmatprep.subr.mxu0 0.0
    %1247 = vmatpush1.msra.mxu0 0.0
    %1248 = vmatprep.subr.mxu0 0.0
    %1249 = vmatpush1.msra.mxu0 0.0
    %1250 = vmatprep.subr.mxu0 0.0
    %1251 = vmatpush1.msra.mxu0 0.0
    %1252 = vmatprep.subr.mxu0 0.0
    %1253 = vmatpush1.msra.mxu0 0.0
    %1254 = vmatprep.subr.mxu0 0.0
    %1255 = vmatpush1.msra.mxu0 0.0
    %1256 = vmatprep.subr.mxu0 0.0
    %1257 = vmatpush1.msra.mxu0 0.0
    %1258 = vmatprep.subr.mxu0 0.0
    %1259 = vmatpush1.msra.mxu0 0.0
    %1260 = vmatprep.subr.mxu0 0.0
    %1261 = vmatpush1.msra.mxu0 0.0
    %1262 = vmatprep.subr.mxu0 0.0
    %1263 = vmatpush1.msra.mxu0 0.0
    %1264 = vmatprep.subr.mxu0 0.0
    %1265 = vmatpush1.msra.mxu0 0.0
    %1266 = vmatprep.subr.mxu0 0.0
    %1267 = vmatpush1.msra.mxu0 0.0
    %1268 = vmatprep.subr.mxu0 0.0
    %1269 = vmatpush1.msra.mxu0 0.0
    %1270 = vmatprep.subr.mxu0 0.0
    %1271 = vmatpush1.msra.mxu0 0.0
    %1272 = vmatprep.subr.mxu0 0.0
    %1273 = vmatpush1.msra.mxu0 0.0
    %1274 = vmatprep.subr.mxu0 0.0
    %1275 = vmatpush1.msra.mxu0 0.0
    %1276 = vmatprep.subr.mxu0 0.0
    %1277 = vmatpush1.msra.mxu0 0.0
    %1278 = vmatprep.subr.mxu0 0.0
    %1279 = vmatpush1.msra.mxu0 0.0
    %1280 = vmatprep.mubr.f32.mxu0 0.0
    %1281 = vmatmul.mubr.f32.gmra.mrb[0].mxu0 %v1214
    %v1282 = vpop.f32.mrb[0].mxu0
    %v1283 = vadd.f32 0.0, %v1282
    %v1284 = vpop.f32.mrb[0].mxu0
    %1285 = vdwg.mxu0
    %v1286 = vld [vmem:[#allocation2 + $0xc] sm:$0x1]
    %v1287 = vadd.f32 %v1286, %v1283
    %v1288 = vmax.f32 %v1287, 0.0
    %1289 = vst [vmem:[#allocation2 + $0xc] sm:$0x1] %v1288
    %v1290 = vld [vmem:[#allocation3 + $0xd] sm:$0x1]
    %v1291 = vld [vmem:[#allocation2] sm:$0xff]
    %v1292 = vld [vmem:[#allocation2 + $0x8] sm:$0xff]
    %v1294 = vsel %vm125, %v1290, 0
    %1296 = vmatprep.subr.mxu0 0.0
    %1297 = vmatpush1.msra.mxu0 %v1291
    %1298 = vmatprep.subr.mxu0 0.0
    %1299 = vmatpush1.msra.mxu0 %v1292
    %1300 = vmatprep.subr.mxu0 0.0
    %1301 = vmatpush1.msra.mxu0 0.0
    %1302 = vmatprep.subr.mxu0 0.0
    %1303 = vmatpush1.msra.mxu0 0.0
    %1304 = vmatprep.subr.mxu0 0.0
    %1305 = vmatpush1.msra.mxu0 0.0
    %1306 = vmatprep.subr.mxu0 0.0
    %1307 = vmatpush1.msra.mxu0 0.0
    %1308 = vmatprep.subr.mxu0 0.0
    %1309 = vmatpush1.msra.mxu0 0.0
    %1310 = vmatprep.subr.mxu0 0.0
    %1311 = vmatpush1.msra.mxu0 0.0
    %1312 = vmatprep.subr.mxu0 0.0
    %1313 = vmatpush1.msra.mxu0 0.0
    %1314 = vmatprep.subr.mxu0 0.0
    %1315 = vmatpush1.msra.mxu0 0.0
    %1316 = vmatprep.subr.mxu0 0.0
    %1317 = vmatpush1.msra.mxu0 0.0
    %1318 = vmatprep.subr.mxu0 0.0
    %1319 = vmatpush1.msra.mxu0 0.0
    %1320 = vmatprep.subr.mxu0 0.0
    %1321 = vmatpush1.msra.mxu0 0.0
    %1322 = vmatprep.subr.mxu0 0.0
    %1323 = vmatpush1.msra.mxu0 0.0
    %1324 = vmatprep.subr.mxu0 0.0
    %1325 = vmatpush1.msra.mxu0 0.0
    %1326 = vmatprep.subr.mxu0 0.0
    %1327 = vmatpush1.msra.mxu0 0.0
    %1328 = vmatprep.subr.mxu0 0.0
    %1329 = vmatpush1.msra.mxu0 0.0
    %1330 = vmatprep.subr.mxu0 0.0
    %1331 = vmatpush1.msra.mxu0 0.0
    %1332 = vmatprep.subr.mxu0 0.0
    %1333 = vmatpush1.msra.mxu0 0.0
    %1334 = vmatprep.subr.mxu0 0.0
    %1335 = vmatpush1.msra.mxu0 0.0
    %1336 = vmatprep.subr.mxu0 0.0
    %1337 = vmatpush1.msra.mxu0 0.0
    %1338 = vmatprep.subr.mxu0 0.0
    %1339 = vmatpush1.msra.mxu0 0.0
    %1340 = vmatprep.subr.mxu0 0.0
    %1341 = vmatpush1.msra.mxu0 0.0
    %1342 = vmatprep.subr.mxu0 0.0
    %1343 = vmatpush1.msra.mxu0 0.0
    %1344 = vmatprep.subr.mxu0 0.0
    %1345 = vmatpush1.msra.mxu0 0.0
    %1346 = vmatprep.subr.mxu0 0.0
    %1347 = vmatpush1.msra.mxu0 0.0
    %1348 = vmatprep.subr.mxu0 0.0
    %1349 = vmatpush1.msra.mxu0 0.0
    %1350 = vmatprep.subr.mxu0 0.0
    %1351 = vmatpush1.msra.mxu0 0.0
    %1352 = vmatprep.subr.mxu0 0.0
    %1353 = vmatpush1.msra.mxu0 0.0
    %1354 = vmatprep.subr.mxu0 0.0
    %1355 = vmatpush1.msra.mxu0 0.0
    %1356 = vmatprep.subr.mxu0 0.0
    %1357 = vmatpush1.msra.mxu0 0.0
    %1358 = vmatprep.subr.mxu0 0.0
    %1359 = vmatpush1.msra.mxu0 0.0
    %1360 = vmatprep.mubr.f32.mxu0 0.0
    %1361 = vmatmul.mubr.f32.gmra.mrb[0].mxu0 %v1294
    %v1362 = vpop.f32.mrb[0].mxu0
    %v1363 = vadd.f32 0.0, %v1362
    %v1364 = vpop.f32.mrb[0].mxu0
    %1365 = vdwg.mxu0
    %v1366 = vld [vmem:[#allocation2 + $0xd] sm:$0x1]
    %v1367 = vadd.f32 %v1366, %v1363
    %v1368 = vmax.f32 %v1367, 0.0
    %1369 = vst [vmem:[#allocation2 + $0xd] sm:$0x1] %v1368
    %v1370 = vld [vmem:[#allocation3 + $0xe] sm:$0x1]
    %v1371 = vld [vmem:[#allocation2] sm:$0xff]
    %v1372 = vld [vmem:[#allocation2 + $0x8] sm:$0xff]
    %v1374 = vsel %vm125, %v1370, 0
    %1376 = vmatprep.subr.mxu0 0.0
    %1377 = vmatpush1.msra.mxu0 %v1371
    %1378 = vmatprep.subr.mxu0 0.0
    %1379 = vmatpush1.msra.mxu0 %v1372
    %1380 = vmatprep.subr.mxu0 0.0
    %1381 = vmatpush1.msra.mxu0 0.0
    %1382 = vmatprep.subr.mxu0 0.0
    %1383 = vmatpush1.msra.mxu0 0.0
    %1384 = vmatprep.subr.mxu0 0.0
    %1385 = vmatpush1.msra.mxu0 0.0
    %1386 = vmatprep.subr.mxu0 0.0
    %1387 = vmatpush1.msra.mxu0 0.0
    %1388 = vmatprep.subr.mxu0 0.0
    %1389 = vmatpush1.msra.mxu0 0.0
    %1390 = vmatprep.subr.mxu0 0.0
    %1391 = vmatpush1.msra.mxu0 0.0
    %1392 = vmatprep.subr.mxu0 0.0
    %1393 = vmatpush1.msra.mxu0 0.0
    %1394 = vmatprep.subr.mxu0 0.0
    %1395 = vmatpush1.msra.mxu0 0.0
    %1396 = vmatprep.subr.mxu0 0.0
    %1397 = vmatpush1.msra.mxu0 0.0
    %1398 = vmatprep.subr.mxu0 0.0
    %1399 = vmatpush1.msra.mxu0 0.0
    %1400 = vmatprep.subr.mxu0 0.0
    %1401 = vmatpush1.msra.mxu0 0.0
    %1402 = vmatprep.subr.mxu0 0.0
    %1403 = vmatpush1.msra.mxu0 0.0
    %1404 = vmatprep.subr.mxu0 0.0
    %1405 = vmatpush1.msra.mxu0 0.0
    %1406 = vmatprep.subr.mxu0 0.0
    %1407 = vmatpush1.msra.mxu0 0.0
    %1408 = vmatprep.subr.mxu0 0.0
    %1409 = vmatpush1.msra.mxu0 0.0
    %1410 = vmatprep.subr.mxu0 0.0
    %1411 = vmatpush1.msra.mxu0 0.0
    %1412 = vmatprep.subr.mxu0 0.0
    %1413 = vmatpush1.msra.mxu0 0.0
    %1414 = vmatprep.subr.mxu0 0.0
    %1415 = vmatpush1.msra.mxu0 0.0
    %1416 = vmatprep.subr.mxu0 0.0
    %1417 = vmatpush1.msra.mxu0 0.0
    %1418 = vmatprep.subr.mxu0 0.0
    %1419 = vmatpush1.msra.mxu0 0.0
    %1420 = vmatprep.subr.mxu0 0.0
    %1421 = vmatpush1.msra.mxu0 0.0
    %1422 = vmatprep.subr.mxu0 0.0
    %1423 = vmatpush1.msra.mxu0 0.0
    %1424 = vmatprep.subr.mxu0 0.0
    %1425 = vmatpush1.msra.mxu0 0.0
    %1426 = vmatprep.subr.mxu0 0.0
    %1427 = vmatpush1.msra.mxu0 0.0
    %1428 = vmatprep.subr.mxu0 0.0
    %1429 = vmatpush1.msra.mxu0 0.0
    %1430 = vmatprep.subr.mxu0 0.0
    %1431 = vmatpush1.msra.mxu0 0.0
    %1432 = vmatprep.subr.mxu0 0.0
    %1433 = vmatpush1.msra.mxu0 0.0
    %1434 = vmatprep.subr.mxu0 0.0
    %1435 = vmatpush1.msra.mxu0 0.0
    %1436 = vmatprep.subr.mxu0 0.0
    %1437 = vmatpush1.msra.mxu0 0.0
    %1438 = vmatprep.subr.mxu0 0.0
    %1439 = vmatpush1.msra.mxu0 0.0
    %1440 = vmatprep.mubr.f32.mxu0 0.0
    %1441 = vmatmul.mubr.f32.gmra.mrb[0].mxu0 %v1374
    %v1442 = vpop.f32.mrb[0].mxu0
    %v1443 = vadd.f32 0.0, %v1442
    %v1444 = vpop.f32.mrb[0].mxu0
    %1445 = vdwg.mxu0
    %v1446 = vld [vmem:[#allocation2 + $0xe] sm:$0x1]
    %v1447 = vadd.f32 %v1446, %v1443
    %v1448 = vmax.f32 %v1447, 0.0
    %1449 = vst [vmem:[#allocation2 + $0xe] sm:$0x1] %v1448
    %v1450 = vld [vmem:[#allocation3 + $0xf] sm:$0x1]
    %v1451 = vld [vmem:[#allocation2] sm:$0xff]
    %v1452 = vld [vmem:[#allocation2 + $0x8] sm:$0xff]
    %v1454 = vsel %vm125, %v1450, 0
    %1456 = vmatprep.subr.mxu0 0.0
    %1457 = vmatpush1.msra.mxu0 %v1451
    %1458 = vmatprep.subr.mxu0 0.0
    %1459 = vmatpush1.msra.mxu0 %v1452
    %1460 = vmatprep.subr.mxu0 0.0
    %1461 = vmatpush1.msra.mxu0 0.0
    %1462 = vmatprep.subr.mxu0 0.0
    %1463 = vmatpush1.msra.mxu0 0.0
    %1464 = vmatprep.subr.mxu0 0.0
    %1465 = vmatpush1.msra.mxu0 0.0
    %1466 = vmatprep.subr.mxu0 0.0
    %1467 = vmatpush1.msra.mxu0 0.0
    %1468 = vmatprep.subr.mxu0 0.0
    %1469 = vmatpush1.msra.mxu0 0.0
    %1470 = vmatprep.subr.mxu0 0.0
    %1471 = vmatpush1.msra.mxu0 0.0
    %1472 = vmatprep.subr.mxu0 0.0
    %1473 = vmatpush1.msra.mxu0 0.0
    %1474 = vmatprep.subr.mxu0 0.0
    %1475 = vmatpush1.msra.mxu0 0.0
    %1476 = vmatprep.subr.mxu0 0.0
    %1477 = vmatpush1.msra.mxu0 0.0
    %1478 = vmatprep.subr.mxu0 0.0
    %1479 = vmatpush1.msra.mxu0 0.0
    %1480 = vmatprep.subr.mxu0 0.0
    %1481 = vmatpush1.msra.mxu0 0.0
    %1482 = vmatprep.subr.mxu0 0.0
    %1483 = vmatpush1.msra.mxu0 0.0
    %1484 = vmatprep.subr.mxu0 0.0
    %1485 = vmatpush1.msra.mxu0 0.0
    %1486 = vmatprep.subr.mxu0 0.0
    %1487 = vmatpush1.msra.mxu0 0.0
    %1488 = vmatprep.subr.mxu0 0.0
    %1489 = vmatpush1.msra.mxu0 0.0
    %1490 = vmatprep.subr.mxu0 0.0
    %1491 = vmatpush1.msra.mxu0 0.0
    %1492 = vmatprep.subr.mxu0 0.0
    %1493 = vmatpush1.msra.mxu0 0.0
    %1494 = vmatprep.subr.mxu0 0.0
    %1495 = vmatpush1.msra.mxu0 0.0
    %1496 = vmatprep.subr.mxu0 0.0
    %1497 = vmatpush1.msra.mxu0 0.0
    %1498 = vmatprep.subr.mxu0 0.0
    %1499 = vmatpush1.msra.mxu0 0.0
    %1500 = vmatprep.subr.mxu0 0.0
    %1501 = vmatpush1.msra.mxu0 0.0
    %1502 = vmatprep.subr.mxu0 0.0
    %1503 = vmatpush1.msra.mxu0 0.0
    %1504 = vmatprep.subr.mxu0 0.0
    %1505 = vmatpush1.msra.mxu0 0.0
    %1506 = vmatprep.subr.mxu0 0.0
    %1507 = vmatpush1.msra.mxu0 0.0
    %1508 = vmatprep.subr.mxu0 0.0
    %1509 = vmatpush1.msra.mxu0 0.0
    %1510 = vmatprep.subr.mxu0 0.0
    %1511 = vmatpush1.msra.mxu0 0.0
    %1512 = vmatprep.subr.mxu0 0.0
    %1513 = vmatpush1.msra.mxu0 0.0
    %1514 = vmatprep.subr.mxu0 0.0
    %1515 = vmatpush1.msra.mxu0 0.0
    %1516 = vmatprep.subr.mxu0 0.0
    %1517 = vmatpush1.msra.mxu0 0.0
    %1518 = vmatprep.subr.mxu0 0.0
    %1519 = vmatpush1.msra.mxu0 0.0
    %1520 = vmatprep.mubr.f32.mxu0 0.0
    %1521 = vmatmul.mubr.f32.gmra.mrb[0].mxu0 %v1454
    %v1522 = vpop.f32.mrb[0].mxu0
    %v1523 = vadd.f32 0.0, %v1522
    %v1524 = vpop.f32.mrb[0].mxu0
    %1525 = vdwg.mxu0
    %v1526 = vld [vmem:[#allocation2 + $0xf] sm:$0x1]
    %v1527 = vadd.f32 %v1526, %v1523
    %v1528 = vmax.f32 %v1527, 0.0
    %1529 = vst [vmem:[#allocation2 + $0xf] sm:$0x1] %v1528
    %v1530 = vld [vmem:[#allocation2] sm:$0xff]
    %v1531 = vld [vmem:[#allocation2 + $0x8] sm:$0xff]
    %v1532 = vld [vmem:[#allocation10] sm:$0xff]
    %v1533 = vld [vmem:[#allocation10 + $0x8] sm:$0xff]
    %v1534 = vld [vmem:[#allocation10 + $0x10] sm:$0xff]
    %v1535 = vld [vmem:[#allocation10 + $0x18] sm:$0xff]
    %v1536 = vld [vmem:[#allocation10 + $0x20] sm:$0xff]
    %v1537 = vld [vmem:[#allocation10 + $0x28] sm:$0xff]
    %v1538 = vld [vmem:[#allocation10 + $0x30] sm:$0xff]
    %v1539 = vld [vmem:[#allocation10 + $0x38] sm:$0xff]
    %v1540 = vld [vmem:[#allocation10 + $0x40] sm:$0xff]
    %v1541 = vld [vmem:[#allocation10 + $0x48] sm:$0xff]
    %v1542 = vld [vmem:[#allocation10 + $0x50] sm:$0xff]
    %v1543 = vld [vmem:[#allocation10 + $0x58] sm:$0xff]
    %v1544 = vld [vmem:[#allocation10 + $0x60] sm:$0xff]
    %v1545 = vld [vmem:[#allocation10 + $0x68] sm:$0xff]
    %v1546 = vld [vmem:[#allocation10 + $0x70] sm:$0xff]
    %v1547 = vld [vmem:[#allocation10 + $0x78] sm:$0xff]
    %v1548 = vld [vmem:[%s5] sm:$0x1]
    %v1550 = vlaneseq
    %v1551 = vshrl.u32 %v1550, 7
    %v1552 = vsub.s32 0, %v1551
    %v1553 = vrot.slane %v1548, %v1552
    %1555 = vmatprep.subr.mxu0 0.0
    %1556 = vmatpush1.msra.mxu0 %v1532
    %1557 = vmatprep.subr.mxu0 0.0
    %1558 = vmatpush1.msra.mxu0 %v1533
    %1559 = vmatprep.subr.mxu0 0.0
    %1560 = vmatpush1.msra.mxu0 %v1534
    %1561 = vmatprep.subr.mxu0 0.0
    %1562 = vmatpush1.msra.mxu0 %v1535
    %1563 = vmatprep.subr.mxu0 0.0
    %1564 = vmatpush1.msra.mxu0 %v1536
    %1565 = vmatprep.subr.mxu0 0.0
    %1566 = vmatpush1.msra.mxu0 %v1537
    %1567 = vmatprep.subr.mxu0 0.0
    %1568 = vmatpush1.msra.mxu0 %v1538
    %1569 = vmatprep.subr.mxu0 0.0
    %1570 = vmatpush1.msra.mxu0 %v1539
    %1571 = vmatprep.subr.mxu0 0.0
    %1572 = vmatpush1.msra.mxu0 %v1540
    %1573 = vmatprep.subr.mxu0 0.0
    %1574 = vmatpush1.msra.mxu0 %v1541
    %1575 = vmatprep.subr.mxu0 0.0
    %1576 = vmatpush1.msra.mxu0 %v1542
    %1577 = vmatprep.subr.mxu0 0.0
    %1578 = vmatpush1.msra.mxu0 %v1543
    %1579 = vmatprep.subr.mxu0 0.0
    %1580 = vmatpush1.msra.mxu0 %v1544
    %1581 = vmatprep.subr.mxu0 0.0
    %1582 = vmatpush1.msra.mxu0 %v1545
    %1583 = vmatprep.subr.mxu0 0.0
    %1584 = vmatpush1.msra.mxu0 %v1546
    %1585 = vmatprep.subr.mxu0 0.0
    %1586 = vmatpush1.msra.mxu0 %v1547
    %1587 = vmatprep.subr.mxu0 0.0
    %1588 = vmatpush1.msra.mxu0 0.0
    %1589 = vmatprep.subr.mxu0 0.0
    %1590 = vmatpush1.msra.mxu0 0.0
    %1591 = vmatprep.subr.mxu0 0.0
    %1592 = vmatpush1.msra.mxu0 0.0
    %1593 = vmatprep.subr.mxu0 0.0
    %1594 = vmatpush1.msra.mxu0 0.0
    %1595 = vmatprep.subr.mxu0 0.0
    %1596 = vmatpush1.msra.mxu0 0.0
    %1597 = vmatprep.subr.mxu0 0.0
    %1598 = vmatpush1.msra.mxu0 0.0
    %1599 = vmatprep.subr.mxu0 0.0
    %1600 = vmatpush1.msra.mxu0 0.0
    %1601 = vmatprep.subr.mxu0 0.0
    %1602 = vmatpush1.msra.mxu0 0.0
    %1603 = vmatprep.subr.mxu0 0.0
    %1604 = vmatpush1.msra.mxu0 0.0
    %1605 = vmatprep.subr.mxu0 0.0
    %1606 = vmatpush1.msra.mxu0 0.0
    %1607 = vmatprep.subr.mxu0 0.0
    %1608 = vmatpush1.msra.mxu0 0.0
    %1609 = vmatprep.subr.mxu0 0.0
    %1610 = vmatpush1.msra.mxu0 0.0
    %1611 = vmatprep.subr.mxu0 0.0
    %1612 = vmatpush1.msra.mxu0 0.0
    %1613 = vmatprep.subr.mxu0 0.0
    %1614 = vmatpush1.msra.mxu0 0.0
    %1615 = vmatprep.subr.mxu0 0.0
    %1616 = vmatpush1.msra.mxu0 0.0
    %1617 = vmatprep.subr.mxu0 0.0
    %1618 = vmatpush1.msra.mxu0 0.0
    %1619 = vmatprep.mubr.f32.mxu0 0.0
    %1620 = vmatmul.mubr.f32.gmra.mrb[0].mxu0 %v1530
    %v1621 = vpop.f32.mrb[0].mxu0
    %v1622 = vadd.f32 %v1553, %v1621
    %v1623 = vpop.f32.mrb[0].mxu0
    %1624 = vmatprep.mubr.f32.mxu0 0.0
    %1625 = vmatmul.mubr.f32.gmra.mrb[0].mxu0 %v1531
    %v1626 = vpop.f32.mrb[0].mxu0
    %v1627 = vadd.f32 %v1553, %v1626
    %v1628 = vpop.f32.mrb[0].mxu0
    %1629 = vdwg.mxu0
    %v1630 = vmax.f32 %v1622, 0.0
    %v1631 = vmax.f32 %v1627, 0.0
    %v1632 = vld [vmem:[#allocation3] sm:$0xff]
    %v1633 = vld [vmem:[#allocation3 + $0x8] sm:$0xff]
    %v1635 = vsel %vm125, %v1632, 0
    %v1638 = vsel %vm125, %v1633, 0
    %1640 = vmatprep.subr.mxu0 0.0
    %1641 = vmatpush1.msra.mxu0 %v1630
    %1642 = vmatprep.subr.mxu0 0.0
    %1643 = vmatpush1.msra.mxu0 %v1631
    %1644 = vmatprep.subr.mxu0 0.0
    %1645 = vmatpush1.msra.mxu0 0.0
    %1646 = vmatprep.subr.mxu0 0.0
    %1647 = vmatpush1.msra.mxu0 0.0
    %1648 = vmatprep.subr.mxu0 0.0
    %1649 = vmatpush1.msra.mxu0 0.0
    %1650 = vmatprep.subr.mxu0 0.0
    %1651 = vmatpush1.msra.mxu0 0.0
    %1652 = vmatprep.subr.mxu0 0.0
    %1653 = vmatpush1.msra.mxu0 0.0
    %1654 = vmatprep.subr.mxu0 0.0
    %1655 = vmatpush1.msra.mxu0 0.0
    %1656 = vmatprep.subr.mxu0 0.0
    %1657 = vmatpush1.msra.mxu0 0.0
    %1658 = vmatprep.subr.mxu0 0.0
    %1659 = vmatpush1.msra.mxu0 0.0
    %1660 = vmatprep.subr.mxu0 0.0
    %1661 = vmatpush1.msra.mxu0 0.0
    %1662 = vmatprep.subr.mxu0 0.0
    %1663 = vmatpush1.msra.mxu0 0.0
    %1664 = vmatprep.subr.mxu0 0.0
    %1665 = vmatpush1.msra.mxu0 0.0
    %1666 = vmatprep.subr.mxu0 0.0
    %1667 = vmatpush1.msra.mxu0 0.0
    %1668 = vmatprep.subr.mxu0 0.0
    %1669 = vmatpush1.msra.mxu0 0.0
    %1670 = vmatprep.subr.mxu0 0.0
    %1671 = vmatpush1.msra.mxu0 0.0
    %1672 = vmatprep.subr.mxu0 0.0
    %1673 = vmatpush1.msra.mxu0 0.0
    %1674 = vmatprep.subr.mxu0 0.0
    %1675 = vmatpush1.msra.mxu0 0.0
    %1676 = vmatprep.subr.mxu0 0.0
    %1677 = vmatpush1.msra.mxu0 0.0
    %1678 = vmatprep.subr.mxu0 0.0
    %1679 = vmatpush1.msra.mxu0 0.0
    %1680 = vmatprep.subr.mxu0 0.0
    %1681 = vmatpush1.msra.mxu0 0.0
    %1682 = vmatprep.subr.mxu0 0.0
    %1683 = vmatpush1.msra.mxu0 0.0
    %1684 = vmatprep.subr.mxu0 0.0
    %1685 = vmatpush1.msra.mxu0 0.0
    %1686 = vmatprep.subr.mxu0 0.0
    %1687 = vmatpush1.msra.mxu0 0.0
    %1688 = vmatprep.subr.mxu0 0.0
    %1689 = vmatpush1.msra.mxu0 0.0
    %1690 = vmatprep.subr.mxu0 0.0
    %1691 = vmatpush1.msra.mxu0 0.0
    %1692 = vmatprep.subr.mxu0 0.0
    %1693 = vmatpush1.msra.mxu0 0.0
    %1694 = vmatprep.subr.mxu0 0.0
    %1695 = vmatpush1.msra.mxu0 0.0
    %1696 = vmatprep.subr.mxu0 0.0
    %1697 = vmatpush1.msra.mxu0 0.0
    %1698 = vmatprep.subr.mxu0 0.0
    %1699 = vmatpush1.msra.mxu0 0.0
    %1700 = vmatprep.subr.mxu0 0.0
    %1701 = vmatpush1.msra.mxu0 0.0
    %1702 = vmatprep.subr.mxu0 0.0
    %1703 = vmatpush1.msra.mxu0 0.0
    %1704 = vmatprep.mubr.f32.mxu0 0.0
    %1705 = vmatmul.mubr.f32.gmra.mrb[0].mxu0 %v1635
    %v1706 = vpop.f32.mrb[0].mxu0
    %v1707 = vadd.f32 0.0, %v1706
    %v1708 = vpop.f32.mrb[0].mxu0
    %1709 = vmatprep.mubr.f32.mxu0 0.0
    %1710 = vmatmul.mubr.f32.gmra.mrb[0].mxu0 %v1638
    %v1711 = vpop.f32.mrb[0].mxu0
    %v1712 = vadd.f32 0.0, %v1711
    %v1713 = vpop.f32.mrb[0].mxu0
    %1714 = vdwg.mxu0
    %v1715 = vadd.f32 %v1630, %v1707
    %v1716 = vadd.f32 %v1631, %v1712
    %v1717 = vmax.f32 %v1715, 0.0
    %v1718 = vmax.f32 %v1716, 0.0
    %1719 = vst [vmem:[#allocation15] sm:$0xff] %v1717
    %1720 = vst [vmem:[#allocation15 + $0x8] sm:$0xff] %v1718
    %v1721 = vld [vmem:[#allocation12] sm:$0xff]
    %v1722 = vld [vmem:[#allocation12 + $0x8] sm:$0xff]
    %v1723 = vld [vmem:[#allocation12 + $0x10] sm:$0xff]
    %v1724 = vld [vmem:[#allocation12 + $0x18] sm:$0xff]
    %v1725 = vld [vmem:[#allocation12 + $0x20] sm:$0xff]
    %v1726 = vld [vmem:[#allocation12 + $0x28] sm:$0xff]
    %v1727 = vld [vmem:[#allocation12 + $0x30] sm:$0xff]
    %v1728 = vld [vmem:[#allocation12 + $0x38] sm:$0xff]
    %v1729 = vld [vmem:[#allocation12 + $0x40] sm:$0xff]
    %v1730 = vld [vmem:[#allocation12 + $0x48] sm:$0xff]
    %v1731 = vld [vmem:[#allocation12 + $0x50] sm:$0xff]
    %v1732 = vld [vmem:[#allocation12 + $0x58] sm:$0xff]
    %v1733 = vld [vmem:[#allocation12 + $0x60] sm:$0xff]
    %v1734 = vld [vmem:[#allocation12 + $0x68] sm:$0xff]
    %v1735 = vld [vmem:[#allocation12 + $0x70] sm:$0xff]
    %v1736 = vld [vmem:[#allocation12 + $0x78] sm:$0xff]
    %v1737 = vld [vmem:[%s8] sm:$0x1]
    %v1739 = vlaneseq
    %v1740 = vshrl.u32 %v1739, 7
    %v1741 = vsub.s32 0, %v1740
    %v1742 = vrot.slane %v1737, %v1741
    %1744 = vmatprep.subr.mxu0 0.0
    %1745 = vmatpush1.msra.mxu0 %v1721
    %1746 = vmatprep.subr.mxu0 0.0
    %1747 = vmatpush1.msra.mxu0 %v1722
    %1748 = vmatprep.subr.mxu0 0.0
    %1749 = vmatpush1.msra.mxu0 %v1723
    %1750 = vmatprep.subr.mxu0 0.0
    %1751 = vmatpush1.msra.mxu0 %v1724
    %1752 = vmatprep.subr.mxu0 0.0
    %1753 = vmatpush1.msra.mxu0 %v1725
    %1754 = vmatprep.subr.mxu0 0.0
    %1755 = vmatpush1.msra.mxu0 %v1726
    %1756 = vmatprep.subr.mxu0 0.0
    %1757 = vmatpush1.msra.mxu0 %v1727
    %1758 = vmatprep.subr.mxu0 0.0
    %1759 = vmatpush1.msra.mxu0 %v1728
    %1760 = vmatprep.subr.mxu0 0.0
    %1761 = vmatpush1.msra.mxu0 %v1729
    %1762 = vmatprep.subr.mxu0 0.0
    %1763 = vmatpush1.msra.mxu0 %v1730
    %1764 = vmatprep.subr.mxu0 0.0
    %1765 = vmatpush1.msra.mxu0 %v1731
    %1766 = vmatprep.subr.mxu0 0.0
    %1767 = vmatpush1.msra.mxu0 %v1732
    %1768 = vmatprep.subr.mxu0 0.0
    %1769 = vmatpush1.msra.mxu0 %v1733
    %1770 = vmatprep.subr.mxu0 0.0
    %1771 = vmatpush1.msra.mxu0 %v1734
    %1772 = vmatprep.subr.mxu0 0.0
    %1773 = vmatpush1.msra.mxu0 %v1735
    %1774 = vmatprep.subr.mxu0 0.0
    %1775 = vmatpush1.msra.mxu0 %v1736
    %1776 = vmatprep.subr.mxu0 0.0
    %1777 = vmatpush1.msra.mxu0 0.0
    %1778 = vmatprep.subr.mxu0 0.0
    %1779 = vmatpush1.msra.mxu0 0.0
    %1780 = vmatprep.subr.mxu0 0.0
    %1781 = vmatpush1.msra.mxu0 0.0
    %1782 = vmatprep.subr.mxu0 0.0
    %1783 = vmatpush1.msra.mxu0 0.0
    %1784 = vmatprep.subr.mxu0 0.0
    %1785 = vmatpush1.msra.mxu0 0.0
    %1786 = vmatprep.subr.mxu0 0.0
    %1787 = vmatpush1.msra.mxu0 0.0
    %1788 = vmatprep.subr.mxu0 0.0
    %1789 = vmatpush1.msra.mxu0 0.0
    %1790 = vmatprep.subr.mxu0 0.0
    %1791 = vmatpush1.msra.mxu0 0.0
    %1792 = vmatprep.subr.mxu0 0.0
    %1793 = vmatpush1.msra.mxu0 0.0
    %1794 = vmatprep.subr.mxu0 0.0
    %1795 = vmatpush1.msra.mxu0 0.0
    %1796 = vmatprep.subr.mxu0 0.0
    %1797 = vmatpush1.msra.mxu0 0.0
    %1798 = vmatprep.subr.mxu0 0.0
    %1799 = vmatpush1.msra.mxu0 0.0
    %1800 = vmatprep.subr.mxu0 0.0
    %1801 = vmatpush1.msra.mxu0 0.0
    %1802 = vmatprep.subr.mxu0 0.0
    %1803 = vmatpush1.msra.mxu0 0.0
    %1804 = vmatprep.subr.mxu0 0.0
    %1805 = vmatpush1.msra.mxu0 0.0
    %1806 = vmatprep.subr.mxu0 0.0
    %1807 = vmatpush1.msra.mxu0 0.0
    %1808 = vmatprep.mubr.f32.mxu0 0.0
    %1809 = vmatmul.mubr.f32.gmra.mrb[0].mxu0 %v1717
    %v1810 = vpop.f32.mrb[0].mxu0
    %v1811 = vadd.f32 %v1742, %v1810
    %v1812 = vpop.f32.mrb[0].mxu0
    %1813 = vmatprep.mubr.f32.mxu0 0.0
    %1814 = vmatmul.mubr.f32.gmra.mrb[0].mxu0 %v1718
    %v1815 = vpop.f32.mrb[0].mxu0
    %v1816 = vadd.f32 %v1742, %v1815
    %v1817 = vpop.f32.mrb[0].mxu0
    %1818 = vdwg.mxu0
    %1819 = vst [vmem:[#allocation16] sm:$0xff] %v1811
    %1820 = vst [vmem:[#allocation16 + $0x8] sm:$0xff] %v1816
    %v1821 = vld [vmem:[#allocation13] sm:$0xff]
    %v1822 = vld [vmem:[#allocation13 + $0x8] sm:$0xff]
    %v1823 = vld [vmem:[#allocation13 + $0x10] sm:$0xff]
    %v1824 = vld [vmem:[#allocation13 + $0x18] sm:$0xff]
    %v1825 = vld [vmem:[#allocation13 + $0x20] sm:$0xff]
    %v1826 = vld [vmem:[#allocation13 + $0x28] sm:$0xff]
    %v1827 = vld [vmem:[#allocation13 + $0x30] sm:$0xff]
    %v1828 = vld [vmem:[#allocation13 + $0x38] sm:$0xff]
    %v1829 = vld [vmem:[#allocation13 + $0x40] sm:$0xff]
    %v1830 = vld [vmem:[#allocation13 + $0x48] sm:$0xff]
    %v1831 = vld [vmem:[#allocation13 + $0x50] sm:$0xff]
    %v1832 = vld [vmem:[#allocation13 + $0x58] sm:$0xff]
    %v1833 = vld [vmem:[#allocation13 + $0x60] sm:$0xff]
    %v1834 = vld [vmem:[#allocation13 + $0x68] sm:$0xff]
    %v1835 = vld [vmem:[#allocation13 + $0x70] sm:$0xff]
    %v1836 = vld [vmem:[#allocation13 + $0x78] sm:$0xff]
    %1837 = vmatprep.subr.mxu0 0.0
    %1838 = vmatpush1.msra.mxu0 %v1821
    %1839 = vmatprep.subr.mxu0 0.0
    %1840 = vmatpush1.msra.mxu0 %v1822
    %1841 = vmatprep.subr.mxu0 0.0
    %1842 = vmatpush1.msra.mxu0 %v1823
    %1843 = vmatprep.subr.mxu0 0.0
    %1844 = vmatpush1.msra.mxu0 %v1824
    %1845 = vmatprep.subr.mxu0 0.0
    %1846 = vmatpush1.msra.mxu0 %v1825
    %1847 = vmatprep.subr.mxu0 0.0
    %1848 = vmatpush1.msra.mxu0 %v1826
    %1849 = vmatprep.subr.mxu0 0.0
    %1850 = vmatpush1.msra.mxu0 %v1827
    %1851 = vmatprep.subr.mxu0 0.0
    %1852 = vmatpush1.msra.mxu0 %v1828
    %1853 = vmatprep.subr.mxu0 0.0
    %1854 = vmatpush1.msra.mxu0 %v1829
    %1855 = vmatprep.subr.mxu0 0.0
    %1856 = vmatpush1.msra.mxu0 %v1830
    %1857 = vmatprep.subr.mxu0 0.0
    %1858 = vmatpush1.msra.mxu0 %v1831
    %1859 = vmatprep.subr.mxu0 0.0
    %1860 = vmatpush1.msra.mxu0 %v1832
    %1861 = vmatprep.subr.mxu0 0.0
    %1862 = vmatpush1.msra.mxu0 %v1833
    %1863 = vmatprep.subr.mxu0 0.0
    %1864 = vmatpush1.msra.mxu0 %v1834
    %1865 = vmatprep.subr.mxu0 0.0
    %1866 = vmatpush1.msra.mxu0 %v1835
    %1867 = vmatprep.subr.mxu0 0.0
    %1868 = vmatpush1.msra.mxu0 %v1836
    %1869 = vmatprep.subr.mxu0 0.0
    %1870 = vmatpush1.msra.mxu0 0.0
    %1871 = vmatprep.subr.mxu0 0.0
    %1872 = vmatpush1.msra.mxu0 0.0
    %1873 = vmatprep.subr.mxu0 0.0
    %1874 = vmatpush1.msra.mxu0 0.0
    %1875 = vmatprep.subr.mxu0 0.0
    %1876 = vmatpush1.msra.mxu0 0.0
    %1877 = vmatprep.subr.mxu0 0.0
    %1878 = vmatpush1.msra.mxu0 0.0
    %1879 = vmatprep.subr.mxu0 0.0
    %1880 = vmatpush1.msra.mxu0 0.0
    %1881 = vmatprep.subr.mxu0 0.0
    %1882 = vmatpush1.msra.mxu0 0.0
    %1883 = vmatprep.subr.mxu0 0.0
    %1884 = vmatpush1.msra.mxu0 0.0
    %1885 = vmatprep.subr.mxu0 0.0
    %1886 = vmatpush1.msra.mxu0 0.0
    %1887 = vmatprep.subr.mxu0 0.0
    %1888 = vmatpush1.msra.mxu0 0.0
    %1889 = vmatprep.subr.mxu0 0.0
    %1890 = vmatpush1.msra.mxu0 0.0
    %1891 = vmatprep.subr.mxu0 0.0
    %1892 = vmatpush1.msra.mxu0 0.0
    %1893 = vmatprep.subr.mxu0 0.0
    %1894 = vmatpush1.msra.mxu0 0.0
    %1895 = vmatprep.subr.mxu0 0.0
    %1896 = vmatpush1.msra.mxu0 0.0
    %1897 = vmatprep.subr.mxu0 0.0
    %1898 = vmatpush1.msra.mxu0 0.0
    %1899 = vmatprep.subr.mxu0 0.0
    %1900 = vmatpush1.msra.mxu0 0.0
    %1901 = vmatprep.mubr.f32.mxu0 0.0
    %1902 = vmatmul.mubr.f32.gmra.mrb[0].mxu0 %v1717
    %v1903 = vpop.f32.mrb[0].mxu0
    %v1904 = vadd.f32 0.0, %v1903
    %v1905 = vpop.f32.mrb[0].mxu0
    %1906 = vmatprep.mubr.f32.mxu0 0.0
    %1907 = vmatmul.mubr.f32.gmra.mrb[0].mxu0 %v1718
    %v1908 = vpop.f32.mrb[0].mxu0
    %v1909 = vadd.f32 0.0, %v1908
    %v1910 = vpop.f32.mrb[0].mxu0
    %1911 = vdwg.mxu0
    %1912 = vst [vmem:[#allocation18] sm:$0xff] %v1904
    %1913 = vst [vmem:[#allocation18 + $0x8] sm:$0xff] %v1909
    // Predicated region
    $region62: #{tpu_custom_call.1} parent=1 // pred_check
      _
    $region63: #{tpu_custom_call.1} parent=1 // pred_check_branch
      %1915 = sbr.rel (0) target = $region65
    $region64: #{tpu_custom_call.1} parent=1 // pred_region
      %s1917 = ssub.s32 256, 256
      %1918 = vsyncadd [#allocation6], %s1917
      %s1919 = sshll.u32 [#allocation15], 4
      %s1920 = int_to_ptr.vmem [resolvable:$true] %s1919
      %1925 = dma.vmem_to_hbm [thread:$0]  %s1920, 256, %s9, [#allocation6], 128, 128, 8
    $region65: #{tpu_custom_call.1} parent=1 // pred_fallthru
      _
    // Predicated region
    $region66: #{tpu_custom_call.1} parent=1 // pred_check
      _
    $region67: #{tpu_custom_call.1} parent=1 // pred_check_branch
      %1927 = sbr.rel (0) target = $region69
    $region68: #{tpu_custom_call.1} parent=1 // pred_region
      %s1929 = ssub.s32 256, 256
      %1930 = vsyncadd [#allocation17], %s1929
      %s1931 = sshll.u32 [#allocation16], 4
      %s1932 = int_to_ptr.vmem [resolvable:$true] %s1931
      %1937 = dma.vmem_to_hbm [thread:$0]  %s1932, 256, %s10, [#allocation17], 128, 128, 8
    $region69: #{tpu_custom_call.1} parent=1 // pred_fallthru
      _
    // Predicated region
    $region70: #{tpu_custom_call.1} parent=1 // pred_check
      _
    $region71: #{tpu_custom_call.1} parent=1 // pred_check_branch
      %1939 = sbr.rel (0) target = $region73
    $region72: #{tpu_custom_call.1} parent=1 // pred_region
      %s1941 = ssub.s32 256, 256
      %1942 = vsyncadd [#allocation17], %s1941
      %s1943 = sshll.u32 [#allocation18], 4
      %s1944 = int_to_ptr.vmem [resolvable:$true] %s1943
      %1949 = dma.vmem_to_hbm [thread:$0]  %s1944, 256, %s11, [#allocation17], 128, 128, 8
    $region73: #{tpu_custom_call.1} parent=1 // pred_fallthru
      _
    // Predicated region
    $region74: #{tpu_custom_call.1} parent=1 // pred_check
      _
    $region75: #{tpu_custom_call.1} parent=1 // pred_check_branch
      %1951 = sbr.rel (0) target = $region77
    $region76: #{tpu_custom_call.1} parent=1 // pred_region
      %1952 = dma.done [#allocation6], 256
    $region77: #{tpu_custom_call.1} parent=1 // pred_fallthru
      _
    // Predicated region
    $region78: #{tpu_custom_call.1} parent=1 // pred_check
      _
    $region79: #{tpu_custom_call.1} parent=1 // pred_check_branch
      %1954 = sbr.rel (0) target = $region81
    $region80: #{tpu_custom_call.1} parent=1 // pred_region
      %1955 = dma.done [#allocation17], 256
    $region81: #{tpu_custom_call.1} parent=1 // pred_fallthru
      _
    // Predicated region
    $region82: #{tpu_custom_call.1} parent=1 // pred_check
      _
    $region83: #{tpu_custom_call.1} parent=1 // pred_check_branch
      %1957 = sbr.rel (0) target = $region85
    $region84: #{tpu_custom_call.1} parent=1 // pred_region
      %1958 = dma.done [#allocation17], 256
    $region85: #{tpu_custom_call.1} parent=1 // pred_fallthru
      _
    %1959 = vsyncpa [#allocation5], 1
    %1960 = vsyncpa [#allocation8], 1
    %1961 = vsyncpa [#allocation11], 1
    %1962 = vsyncpa [#allocation14], 1
    %1963 = vsyncpa [#allocation6], 1
    %1964 = vsyncpa [#allocation17], 1

</llo_original>
